<compile_context>
chip_gen: v6e
topology: v6e:2x2x1
jax: 0.10.0
libtpu: 0.0.40
codegen_flags: <defaults>
</compile_context>

<pallas_src>
import functools

import jax
import jax.numpy as jnp
from jax import lax
from jax.experimental import pallas as pl
from jax.experimental.pallas import tpu as pltpu


def _spatial_attention_kernel(x_ref, w_ref, out_ref, *, C):
    """One grid step = TB batch elements over the full (padded) spatial plane.

    x_ref   : (TB, C, Pp) f32  input block (Pp = H*W padded to a multiple of 128)
    w_ref   : (2*Pp, Pp)  f32  masked conv matrix (rows [0,Pp): avg taps,
                               rows [Pp,2Pp): max taps; zero padding folded in)
    out_ref : (TB, C, Pp)      sigmoid(conv([avg | max])) * x
    """
    xx = x_ref[...]                                      # (TB, C, Pp)
    avg = jnp.sum(xx, axis=1) * (1.0 / C)                # (TB, Pp) channel mean
    mx = jnp.max(xx, axis=1)                             # (TB, Pp) channel max
    pooled = jnp.concatenate([avg, mx], axis=-1)         # (TB, 2*Pp), lane concat

    # Whole 7x7 conv (incl. zero padding) == one small MXU matmul.
    acc = jnp.dot(pooled, w_ref[...],
                  preferred_element_type=jnp.float32,
                  precision=lax.Precision.HIGHEST)       # (TB, Pp)

    # sigmoid = 1 / (1 + exp(-acc)): exp -> EUP, approx reciprocal -> EUP,
    # one Newton step restores ~f32 accuracy for a couple of cheap VPU ops.
    den = 1.0 + jnp.exp(jnp.minimum(-acc, 80.0))         # clamp avoids inf*0 NaN
    r = pl.reciprocal(den, approx=True)
    gate = r * (2.0 - den * r)                           # Newton refinement

    out_ref[...] = (xx * gate[:, None, :]).astype(out_ref.dtype)


def _build_conv_matrix(conv1_weight, H, W, Pp, kernel_size, pad):
    """Fold conv weights + zero padding into a dense (2*Pp, Pp) matrix M so that
    conv_out[p] = sum_q avg[q] * M[q, p] + max[q] * M[Pp + q, p]
    matches Conv2d(2, 1, k, padding=pad, bias=False) (cross-correlation)."""
    P = H * W
    KK = kernel_size * kernel_size
    w = conv1_weight.reshape(2, KK).astype(jnp.float32)          # (2, KK)

    rows = jnp.arange(P, dtype=jnp.int32) // W                   # (P,)
    cols = jnp.arange(P, dtype=jnp.int32) % W
    out_idx = jnp.broadcast_to(jnp.arange(P, dtype=jnp.int32), (KK, P))

    offs = [(di, dj) for di in range(kernel_size) for dj in range(kernel_size)]
    dy = jnp.array([o[0] - pad for o in offs], jnp.int32)[:, None]   # (KK, 1)
    dx = jnp.array([o[1] - pad for o in offs], jnp.int32)[:, None]

    sr = rows[None, :] + dy                                       # (KK, P)
    sc = cols[None, :] + dx
    valid = (sr >= 0) & (sr < H) & (sc >= 0) & (sc < W)
    src = jnp.clip(sr, 0, H - 1) * W + jnp.clip(sc, 0, W - 1)     # (KK, P)

    wa = jnp.where(valid, w[0][:, None], 0.0)                     # (KK, P)
    wm = jnp.where(valid, w[1][:, None], 0.0)

    m = jnp.zeros((2 * Pp, Pp), jnp.float32)
    m = m.at[src, out_idx].add(wa)                                # avg-map taps
    m = m.at[Pp + src, out_idx].add(wm)                           # max-map taps
    return m


def spatial_attention_forward(x, conv1_weight, *, kernel_size=7):
    """x: (B, C, H, W) float32; conv1_weight: (1, 2, k, k) (PyTorch OIHW, no bias)."""
    assert kernel_size in (3, 7), "kernel size must be 3 or 7"
    B, C, H, W = x.shape
    pad = 3 if kernel_size == 7 else 1
    P = H * W
    Pp = max(128, ((P + 127) // 128) * 128)     # lane-dense last dim -> unmasked vst

    x_flat = x.reshape(B, C, P).astype(jnp.float32)
    if Pp != P:
        # Pad lanes are zero; their W_full rows are zero (never feed real outputs)
        # and their outputs are sliced off below.
        x_flat = jnp.pad(x_flat, ((0, 0), (0, 0), (0, Pp - P)))

    w_full = _build_conv_matrix(conv1_weight, H, W, Pp, kernel_size, pad)

    # TB / grid: 2 parallel grid steps when B is even and >= 2 (feeds both v7x
    # TensorCores); on single-core v5e/v6e the extra step is ~0.35 us only.
    TB = B // 2 if (B >= 2 and B % 2 == 0) else 1

    kernel = functools.partial(_spatial_attention_kernel, C=C)
    out_flat = pl.pallas_call(
        kernel,
        out_shape=jax.ShapeDtypeStruct((B, C, Pp), jnp.float32),
        grid_spec=pltpu.PrefetchScalarGridSpec(
            num_scalar_prefetch=0,
            grid=(B // TB,),
            in_specs=[
                pl.BlockSpec((TB, C, Pp), lambda b: (b, 0, 0)),
                pl.BlockSpec((2 * Pp, Pp), lambda b: (0, 0)),   # constant -> DMA'd once
            ],
            out_specs=pl.BlockSpec((TB, C, Pp), lambda b: (b, 0, 0)),
        ),
        compiler_params=pltpu.CompilerParams(
            dimension_semantics=("parallel",)),
    )(x_flat, w_full)

    return out_flat[..., :P].reshape(B, C, H, W).astype(x.dtype)


def reference_forward(x, conv1_weight, *, kernel_size=7):
    """Pure-JAX reference matching the PyTorch module."""
    pad = 3 if kernel_size == 7 else 1
    avg = jnp.mean(x, axis=1, keepdims=True)
    mx = jnp.max(x, axis=1, keepdims=True)
    m = jnp.concatenate([avg, mx], axis=1)               # (B, 2, H, W)
    conv = lax.conv_general_dilated(
        m, conv1_weight, window_strides=(1, 1),
        padding=((pad, pad), (pad, pad)),
        dimension_numbers=("NCHW", "OIHW", "NCHW"),
        precision=lax.Precision.HIGHEST)                 # (B, 1, H, W)
    return jax.nn.sigmoid(conv) * x


if __name__ == "__main__":
    key = jax.random.PRNGKey(0)
    B, C, H, W = 2, 4, 16, 16
    k1, k2 = jax.random.split(key)
    x = jax.random.normal(k1, (B, C, H, W), jnp.float32)
    # Conv2d(2, 1, 7, padding=3, bias=False) weight, PyTorch OIHW layout.
    w = jax.random.normal(k2, (1, 2, 7, 7), jnp.float32) * (1.0 / (2 * 7 * 7) ** 0.5)

    out = jax.block_until_ready(spatial_attention_forward(x, w))
    ref = reference_forward(x, w)

    assert out.shape == (B, C, H, W)
    max_err = float(jnp.max(jnp.abs(out - ref)))
    # Tolerance covers the approx-reciprocal + Newton sigmoid and MXU summation order.
    assert max_err < 2e-3, f"max_err={max_err}"
    print("KERNEL_OK")
</pallas_src>

<mosaic_0001>
module attributes {stable_mosaic.version = 11 : i64} {
  func.func @_spatial_attention_kernel(%arg0: i32, %arg1: memref<1x4x256xf32, #tpu.memory_space<vmem>>, %arg2: memref<512x256xf32, #tpu.memory_space<vmem>>, %arg3: memref<1x4x256xf32, #tpu.memory_space<vmem>>) attributes {dimension_semantics = [#tpu.dimension_semantics<parallel>], iteration_bounds = array<i64: 2>, scalar_prefetch = 0 : i64, scratch_operands = 0 : i64, tpu.core_type = #tpu.core_type<tc>, window_params = [{transform_indices = @transform_0, window_bounds = array<i64: 1, 4, 256>}, {pipeline_mode = #tpu.pipeline_mode<synchronous>, transform_indices = @transform_1, window_bounds = array<i64: 512, 256>}, {transform_indices = @transform_2, window_bounds = array<i64: 1, 4, 256>}]} {
    %c0 = arith.constant 0 : index
    %c0_0 = arith.constant 0 : index
    %c0_1 = arith.constant 0 : index
    %0 = vector.load %arg1[%c0, %c0_0, %c0_1] : memref<1x4x256xf32, #tpu.memory_space<vmem>>, vector<1x4x256xf32>
    %cst = arith.constant dense<0.000000e+00> : vector<1x256xf32>
    %1 = vector.multi_reduction <add>, %0, %cst [1] : vector<1x4x256xf32> to vector<1x256xf32>
    %cst_2 = arith.constant 2.500000e-01 : f32
    %2 = vector.broadcast %cst_2 : f32 to vector<1x256xf32>
    %3 = arith.mulf %1, %2 : vector<1x256xf32>
    %cst_3 = arith.constant dense<0xFF800000> : vector<1x256xf32>
    %4 = vector.multi_reduction <maximumf>, %0, %cst_3 [1] : vector<1x4x256xf32> to vector<1x256xf32>
    %5 = tpu.concatenate %3, %4 in 1 : vector<1x256xf32>, vector<1x256xf32> -> vector<1x512xf32>
    %c0_4 = arith.constant 0 : index
    %c0_5 = arith.constant 0 : index
    %6 = vector.load %arg2[%c0_4, %c0_5] : memref<512x256xf32, #tpu.memory_space<vmem>>, vector<512x256xf32>
    %cst_6 = arith.constant dense<0.000000e+00> : vector<1x256xf32>
    %7 = tpu.matmul %5, %6, %cst_6 {dimension_numbers = #tpu.dot_dimension_numbers<[1], [0], [0], [1], [0, 0, 1, 1], [], []>, precision = #tpu.contract_precision<fp32>} : vector<1x512xf32>, vector<512x256xf32>, vector<1x256xf32> -> vector<1x256xf32>
    %cst_7 = arith.constant 0.000000e+00 : f32
    %8 = vector.broadcast %cst_7 : f32 to vector<1x256xf32>
    %9 = arith.subf %8, %7 : vector<1x256xf32>
    %cst_8 = arith.constant 8.000000e+01 : f32
    %10 = vector.broadcast %cst_8 : f32 to vector<1x256xf32>
    %11 = arith.minimumf %9, %10 : vector<1x256xf32>
    %12 = math.exp %11 : vector<1x256xf32>
    %cst_9 = arith.constant 1.000000e+00 : f32
    %13 = vector.broadcast %cst_9 : f32 to vector<1x256xf32>
    %14 = arith.addf %13, %12 : vector<1x256xf32>
    %15 = tpu.reciprocal %14 {approx = true} : vector<1x256xf32> -> vector<1x256xf32>
    %16 = arith.mulf %14, %15 : vector<1x256xf32>
    %cst_10 = arith.constant 2.000000e+00 : f32
    %17 = vector.broadcast %cst_10 : f32 to vector<1x256xf32>
    %18 = arith.subf %17, %16 : vector<1x256xf32>
    %19 = arith.mulf %15, %18 : vector<1x256xf32>
    %20 = vector.shape_cast %19 : vector<1x256xf32> to vector<1x1x256xf32>
    %21 = vector.broadcast %20 : vector<1x1x256xf32> to vector<1x4x256xf32>
    %22 = arith.mulf %0, %21 : vector<1x4x256xf32>
    %c0_11 = arith.constant 0 : index
    %c0_12 = arith.constant 0 : index
    %c0_13 = arith.constant 0 : index
    %23 = vector.load %arg3[%c0_11, %c0_12, %c0_13] : memref<1x4x256xf32, #tpu.memory_space<vmem>>, vector<1x4x256xf32>
    tpu.vector_store %arg3[%c0_11, %c0_12, %c0_13], %22 {strides = array<i32>} : memref<1x4x256xf32, #tpu.memory_space<vmem>>, vector<1x4x256xf32>,
    return
  }
  func.func @transform_0(%arg0: i32) -> (i32, i32, i32) {
    %c0_i32 = arith.constant 0 : i32
    %c0_i32_0 = arith.constant 0 : i32
    %c0_i32_1 = arith.constant 0 : i32
    return %arg0, %c0_i32, %c0_i32_0 : i32, i32, i32
  }
  func.func @transform_1(%arg0: i32) -> (i32, i32) {
    %c0_i32 = arith.constant 0 : i32
    %c0_i32_0 = arith.constant 0 : i32
    %c0_i32_1 = arith.constant 0 : i32
    return %c0_i32, %c0_i32_0 : i32, i32
  }
  func.func @transform_2(%arg0: i32) -> (i32, i32, i32) {
    %c0_i32 = arith.constant 0 : i32
    %c0_i32_0 = arith.constant 0 : i32
    %c0_i32_1 = arith.constant 0 : i32
    return %arg0, %c0_i32, %c0_i32_0 : i32, i32, i32
  }
}

</mosaic_0001>

<llo_original>
// kernel: tpu_custom_call.1
$region0: #{tpu_custom_call.1}
  #allocation0 [shape = 'u32[]', space=smem, size = 0x4, offset = 0x4, fixed_abs, tag = 'smem constant byte address 0x4 - core index']
  #allocation1 [shape = 'u32[144,128]{1,0:T(1,128)}', space=vmem, size = 0x12000, scoped, tag = 'internal scratch']
  %s0 = inlined_call_operand.hbm [shape: f32[2,4,256], index: 0, kind: input, shape index: {}]
  %s1 = inlined_call_operand.hbm [shape: f32[512,256], index: 1, kind: input, shape index: {}]
  %s2 = inlined_call_operand.hbm [shape: f32[2,4,256], index: 2, kind: output, shape index: {}]
  %s3 = sld [smem:[#allocation0]]
  $region49: #{tpu_custom_call.1} parent=0
    _
  %s5 = ssub.s32 1, %s3
  %s6 = scalar_select 0, %s5, %s3
  $region1: #{tpu_custom_call.1} parent=0
    #allocation2 [shape = 'u8[8192]{0}', space=vmem, size = 0x2000, scoped, tag = 'input window, operand 0']
    #allocation3 [shape = 's32[2]{0}', space=sflag, size = 0x8, scoped, tag = 'scoped memory for tpu_custom_call.1']
    #allocation4 [shape = 's32[2]{0}', space=sflag, size = 0x8, scoped, tag = 'scoped memory for tpu_custom_call.1']
    #allocation5 [shape = 'u8[524288]{0}', space=vmem, size = 0x80000, scoped, tag = 'input window, operand 1, single buffered']
    #allocation6 [shape = 's32[1]{0}', space=sflag, size = 0x4, scoped, tag = 'scoped memory for tpu_custom_call.1']
    #allocation7 [shape = 'u8[8192]{0}', space=vmem, size = 0x2000, scoped, tag = 'output window, operand 0']
    %7 = vsyncpa [#allocation3], 0
    %s8 = scalar_lea.sflag [#allocation3], 1
    %9 = vsyncpa %s8, 0
    %10 = vsyncpa [#allocation6], 0
    %11 = vsyncpa [#allocation4], 0
    %s12 = scalar_lea.sflag [#allocation4], 1
    %13 = vsyncpa %s12, 0
    loop: start=0, step=1, limit=4
    $region2: #{tpu_custom_call.1} parent=1 // loop_pre_header
      _
    $region3: #{tpu_custom_call.1} parent=1 // loop_header
      %s15 = sphi 0, %s19
      %p16 = scmp.ge.s32.totalorder %s15, 4
      %s25 = sphi 0, %s27
      %s28 = sphi 0, %s25
      %s29 = sphi 0, %s28
      %s45 = sphi 0, %s29
      %s49 = sphi 0, %s49
      %s51 = sphi 0, %s49
      %s52 = sphi 0, %s51
      %s66 = sphi 0, %s52
      %s72 = sphi 0, %s74
      %s75 = sphi 0, %s72
      %s76 = sphi 0, %s75
      %s92 = sphi 0, %s76
    $region4: #{tpu_custom_call.1} parent=1 // loop_header_branch
      %18 = sbr.rel (%p16) target = $region8
    $region5: #{tpu_custom_call.1} parent=1 // loop_body
      %s20 = ssub.s32 %s15, 1
      %s21 = ssub.s32 %s15, 2
      %s22 = sadd.s32 %s15, 1
      %s23 = ssub.s32 %s15, %s22
      %p24 = scmp.eq.s32.totalorder %s23, 0
      %s26 = sadd.s32 %s25, 1
      %s27 = scalar_select %p24, %s25, %s26
      %p30 = pneg %p24
      %p31 = scmp.eq.s32.totalorder %s15, 1
      %p32 = por %p30, %p31
      %p33 = scmp.ne.s32.totalorder %s25, %s28
      %p34 = scmp.eq.s32.totalorder %s15, 0
      %p35 = por %p33, %p34
      %p36 = scmp.ne.s32.totalorder %s25, %s28
      %p37 = scmp.eq.s32.totalorder %s20, 1
      %p38 = por %p36, %p37
      %p39 = scmp.ne.s32.totalorder %s28, %s29
      %p40 = scmp.eq.s32.totalorder %s20, 0
      %p41 = por %p39, %p40
      %p42 = scmp.ne.s32.totalorder %s28, %s29
      %p43 = scmp.eq.s32.totalorder %s21, 1
      %p44 = por %p42, %p43
      %p46 = scmp.ne.s32.totalorder %s29, %s45
      %p47 = scmp.eq.s32.totalorder %s21, 0
      %p48 = por %p46, %p47
      %s50 = sadd.s32 %s49, 1
      %p53 = scmp.eq.s32.totalorder %s15, 1
      %p54 = scmp.ne.s32.totalorder %s49, %s51
      %p55 = scmp.eq.s32.totalorder %s15, 0
      %p56 = por %p54, %p55
      %p57 = scmp.ne.s32.totalorder %s49, %s51
      %p58 = scmp.eq.s32.totalorder %s20, 1
      %p59 = por %p57, %p58
      %p60 = scmp.ne.s32.totalorder %s51, %s52
      %p61 = scmp.eq.s32.totalorder %s20, 0
      %p62 = por %p60, %p61
      %p63 = scmp.ne.s32.totalorder %s51, %s52
      %p64 = scmp.eq.s32.totalorder %s21, 1
      %p65 = por %p63, %p64
      %p67 = scmp.ne.s32.totalorder %s52, %s66
      %p68 = scmp.eq.s32.totalorder %s21, 0
      %p69 = por %p67, %p68
      %s70 = ssub.s32 %s15, %s22
      %p71 = scmp.eq.s32.totalorder %s70, 0
      %s73 = sadd.s32 %s72, 1
      %s74 = scalar_select %p71, %s72, %s73
      %p77 = pneg %p71
      %p78 = scmp.eq.s32.totalorder %s15, 1
      %p79 = por %p77, %p78
      %p80 = scmp.ne.s32.totalorder %s72, %s75
      %p81 = scmp.eq.s32.totalorder %s15, 0
      %p82 = por %p80, %p81
      %p83 = scmp.ne.s32.totalorder %s72, %s75
      %p84 = scmp.eq.s32.totalorder %s20, 1
      %p85 = por %p83, %p84
      %p86 = scmp.ne.s32.totalorder %s75, %s76
      %p87 = scmp.eq.s32.totalorder %s20, 0
      %p88 = por %p86, %p87
      %p89 = scmp.ne.s32.totalorder %s75, %s76
      %p90 = scmp.eq.s32.totalorder %s21, 1
      %p91 = por %p89, %p90
      %p93 = scmp.ne.s32.totalorder %s76, %s92
      %p94 = scmp.eq.s32.totalorder %s21, 0
      %p95 = por %p93, %p94
      %p96 = scmp.le.s32.totalorder 1, %s15
      %p97 = scmp.lt.s32.totalorder %s15, 3
      %p98 = pnand %p96, %p97
      %p99 = pneg %p98
      // Predicated region
      $region9: #{tpu_custom_call.1} parent=5 // pred_check
        _
      $region10: #{tpu_custom_call.1} parent=5 // pred_check_branch
        %101 = sbr.rel (%p98) target = $region12
      $region11: #{tpu_custom_call.1} parent=5 // pred_region
        %s102 = ssub.s32 %s15, 1
        // Predicated region
        $region13: #{tpu_custom_call.1} parent=11 // pred_check
          %p103 = pneg %p62
        $region14: #{tpu_custom_call.1} parent=11 // pred_check_branch
          %105 = sbr.rel (%p103) target = $region16
        $region15: #{tpu_custom_call.1} parent=11 // pred_region
          %s107 = ssub.s32 16384, 16384
          %108 = vsyncadd [#allocation6], %s107
          %s109 = sshll.u32 [#allocation5], 4
          %s110 = int_to_ptr.vmem [resolvable:$true] %s109
          %115 = dma.hbm_to_vmem [thread:$0]  %s1, 16384, %s110, [#allocation6], 256, 256, 16
        $region16: #{tpu_custom_call.1} parent=11 // pred_fallthru
          _
      $region12: #{tpu_custom_call.1} parent=5 // pred_fallthru
        _
      %p116 = scmp.lt.s32.totalorder %s15, 2
      // Predicated region
      $region17: #{tpu_custom_call.1} parent=5 // pred_check
        %p117 = pneg %p116
      $region18: #{tpu_custom_call.1} parent=5 // pred_check_branch
        %119 = sbr.rel (%p117) target = $region20
      $region19: #{tpu_custom_call.1} parent=5 // pred_region
        // Predicated region
        $region21: #{tpu_custom_call.1} parent=19 // pred_check
          %p120 = pneg %p35
        $region22: #{tpu_custom_call.1} parent=19 // pred_check_branch
          %122 = sbr.rel (%p120) target = $region24
        $region23: #{tpu_custom_call.1} parent=19 // pred_region
          %s123 = sand.u32 %s25, 1
          %s124 = scalar_lea.sflag [#allocation3], %s123
          %s125 = sand.u32 %s25, 1
          %s126 = smul.addr %s125, 8
          %s127 = scalar_lea.vmem [#allocation2], %s126
          %s129 = ssub.s32 128, 128
          %130 = vsyncadd %s124, %s129
          %s131 = smul.addr %s15, 2
          %s132 = smul.addr %s131, 64
          %s133 = scalar_lea.hbm %s0, %s132
          %s135 = sshll.u32 %s127, 4
          %s136 = int_to_ptr.vmem [resolvable:$true] %s135
          %138 = dma.hbm_to_vmem [thread:$0]  %s133, 128, %s136, %s124
        $region24: #{tpu_custom_call.1} parent=19 // pred_fallthru
          _
      $region20: #{tpu_custom_call.1} parent=5 // pred_fallthru
        _
      %p139 = scmp.le.s32.totalorder 1, %s15
      %p140 = scmp.lt.s32.totalorder %s15, 3
      %p141 = pnand %p139, %p140
      %p142 = pneg %p141
      // Predicated region
      $region25: #{tpu_custom_call.1} parent=5 // pred_check
        _
      $region26: #{tpu_custom_call.1} parent=5 // pred_check_branch
        %144 = sbr.rel (%p141) target = $region28
      $region27: #{tpu_custom_call.1} parent=5 // pred_region
        %s145 = ssub.s32 %s15, 1
        %s146 = sand.u32 %s28, 1
        %s147 = scalar_lea.sflag [#allocation3], %s146
        %s148 = sand.u32 %s28, 1
        %s149 = smul.addr %s148, 8
        %s150 = scalar_lea.vmem [#allocation2], %s149
        // Predicated region
        $region29: #{tpu_custom_call.1} parent=27 // pred_check
          %p151 = pneg %p41
        $region30: #{tpu_custom_call.1} parent=27 // pred_check_branch
          %153 = sbr.rel (%p151) target = $region32
        $region31: #{tpu_custom_call.1} parent=27 // pred_region
          %154 = dma.done %s147, 128
        $region32: #{tpu_custom_call.1} parent=27 // pred_fallthru
          _
        // Predicated region
        $region33: #{tpu_custom_call.1} parent=27 // pred_check
          %p155 = pneg %p62
        $region34: #{tpu_custom_call.1} parent=27 // pred_check_branch
          %157 = sbr.rel (%p155) target = $region36
        $region35: #{tpu_custom_call.1} parent=27 // pred_region
          %158 = dma.done [#allocation6], 16384
        $region36: #{tpu_custom_call.1} parent=27 // pred_fallthru
          _
        %s159 = sand.u32 %s28, 1
        %s160 = scalar_lea.sflag [#allocation3], %s159
        %s161 = sand.u32 %s28, 1
        %s162 = smul.addr %s161, 8
        %s163 = scalar_lea.vmem [#allocation2], %s162
        %p164 = pneg %p41
        %p165 = pneg %p38
        %p166 = pneg %p62
        %p167 = pneg %p59
        %p168 = pneg %p88
        %p169 = pneg %p85
        %s170 = sand.u32 %s75, 1
        %s171 = scalar_lea.sflag [#allocation4], %s170
        %s172 = sand.u32 %s75, 1
        %s173 = smul.addr %s172, 8
        %s174 = scalar_lea.vmem [#allocation7], %s173
        %v175 = vld [vmem:[%s150] sm:$0xff]
        %v177 = vcombine.high %v175, %v175
        %vm179 = vcmask 1043456
        %v180 = vsel %vm179, %v175, 0.0
        %v181 = vrot.slane %v180, 4
        %v182 = vadd.f32 %v180, %v181
        %v183 = vrot.slane %v182, 2
        %v184 = vadd.f32 %v182, %v183
        %v185 = vrot.slane %v184, 1
        %v186 = vadd.f32 %v184, %v185
        %v187 = vsel %vm179, %v177, 0.0
        %v188 = vrot.slane %v187, 4
        %v189 = vadd.f32 %v187, %v188
        %v190 = vrot.slane %v189, 2
        %v191 = vadd.f32 %v189, %v190
        %v192 = vrot.slane %v191, 1
        %v193 = vadd.f32 %v191, %v192
        %v194 = vmul.f32 %v186, 0.25
        %v195 = vmul.f32 %v193, 0.25
        %v196 = vsel %vm179, %v175, -inf
        %v197 = vrot.slane %v196, 4
        %v198 = vmax.f32 %v196, %v197
        %v199 = vrot.slane %v198, 2
        %v200 = vmax.f32 %v198, %v199
        %v201 = vrot.slane %v200, 1
        %v202 = vmax.f32 %v200, %v201
        %v203 = vsel %vm179, %v177, -inf
        %v204 = vrot.slane %v203, 4
        %v205 = vmax.f32 %v203, %v204
        %v206 = vrot.slane %v205, 2
        %v207 = vmax.f32 %v205, %v206
        %v208 = vrot.slane %v207, 1
        %v209 = vmax.f32 %v207, %v208
        %v210 = vld [vmem:[#allocation5] sm:$0xff]
        %v211 = vld [vmem:[#allocation5 + $0x8] sm:$0xff]
        %v212 = vld [vmem:[#allocation5 + $0x10] sm:$0xff]
        %v213 = vld [vmem:[#allocation5 + $0x18] sm:$0xff]
        %v214 = vld [vmem:[#allocation5 + $0x20] sm:$0xff]
        %v215 = vld [vmem:[#allocation5 + $0x28] sm:$0xff]
        %v216 = vld [vmem:[#allocation5 + $0x30] sm:$0xff]
        %v217 = vld [vmem:[#allocation5 + $0x38] sm:$0xff]
        %v218 = vld [vmem:[#allocation5 + $0x40] sm:$0xff]
        %v219 = vld [vmem:[#allocation5 + $0x48] sm:$0xff]
        %v220 = vld [vmem:[#allocation5 + $0x50] sm:$0xff]
        %v221 = vld [vmem:[#allocation5 + $0x58] sm:$0xff]
        %v222 = vld [vmem:[#allocation5 + $0x60] sm:$0xff]
        %v223 = vld [vmem:[#allocation5 + $0x68] sm:$0xff]
        %v224 = vld [vmem:[#allocation5 + $0x70] sm:$0xff]
        %v225 = vld [vmem:[#allocation5 + $0x78] sm:$0xff]
        %v226 = vld [vmem:[#allocation5 + $0x80] sm:$0xff]
        %v227 = vld [vmem:[#allocation5 + $0x88] sm:$0xff]
        %v228 = vld [vmem:[#allocation5 + $0x90] sm:$0xff]
        %v229 = vld [vmem:[#allocation5 + $0x98] sm:$0xff]
        %v230 = vld [vmem:[#allocation5 + $0xa0] sm:$0xff]
        %v231 = vld [vmem:[#allocation5 + $0xa8] sm:$0xff]
        %v232 = vld [vmem:[#allocation5 + $0xb0] sm:$0xff]
        %v233 = vld [vmem:[#allocation5 + $0xb8] sm:$0xff]
        %v234 = vld [vmem:[#allocation5 + $0xc0] sm:$0xff]
        %v235 = vld [vmem:[#allocation5 + $0xc8] sm:$0xff]
        %v236 = vld [vmem:[#allocation5 + $0xd0] sm:$0xff]
        %v237 = vld [vmem:[#allocation5 + $0xd8] sm:$0xff]
        %v238 = vld [vmem:[#allocation5 + $0xe0] sm:$0xff]
        %v239 = vld [vmem:[#allocation5 + $0xe8] sm:$0xff]
        %v240 = vld [vmem:[#allocation5 + $0xf0] sm:$0xff]
        %v241 = vld [vmem:[#allocation5 + $0xf8] sm:$0xff]
        %v242 = vld [vmem:[#allocation5 + $0x100] sm:$0xff]
        %v243 = vld [vmem:[#allocation5 + $0x108] sm:$0xff]
        %v244 = vld [vmem:[#allocation5 + $0x110] sm:$0xff]
        %v245 = vld [vmem:[#allocation5 + $0x118] sm:$0xff]
        %v246 = vld [vmem:[#allocation5 + $0x120] sm:$0xff]
        %v247 = vld [vmem:[#allocation5 + $0x128] sm:$0xff]
        %v248 = vld [vmem:[#allocation5 + $0x130] sm:$0xff]
        %v249 = vld [vmem:[#allocation5 + $0x138] sm:$0xff]
        %v250 = vld [vmem:[#allocation5 + $0x140] sm:$0xff]
        %v251 = vld [vmem:[#allocation5 + $0x148] sm:$0xff]
        %v252 = vld [vmem:[#allocation5 + $0x150] sm:$0xff]
        %v253 = vld [vmem:[#allocation5 + $0x158] sm:$0xff]
        %v254 = vld [vmem:[#allocation5 + $0x160] sm:$0xff]
        %v255 = vld [vmem:[#allocation5 + $0x168] sm:$0xff]
        %v256 = vld [vmem:[#allocation5 + $0x170] sm:$0xff]
        %v257 = vld [vmem:[#allocation5 + $0x178] sm:$0xff]
        %v258 = vld [vmem:[#allocation5 + $0x180] sm:$0xff]
        %v259 = vld [vmem:[#allocation5 + $0x188] sm:$0xff]
        %v260 = vld [vmem:[#allocation5 + $0x190] sm:$0xff]
        %v261 = vld [vmem:[#allocation5 + $0x198] sm:$0xff]
        %v262 = vld [vmem:[#allocation5 + $0x1a0] sm:$0xff]
        %v263 = vld [vmem:[#allocation5 + $0x1a8] sm:$0xff]
        %v264 = vld [vmem:[#allocation5 + $0x1b0] sm:$0xff]
        %v265 = vld [vmem:[#allocation5 + $0x1b8] sm:$0xff]
        %v266 = vld [vmem:[#allocation5 + $0x1c0] sm:$0xff]
        %v267 = vld [vmem:[#allocation5 + $0x1c8] sm:$0xff]
        %v268 = vld [vmem:[#allocation5 + $0x1d0] sm:$0xff]
        %v269 = vld [vmem:[#allocation5 + $0x1d8] sm:$0xff]
        %v270 = vld [vmem:[#allocation5 + $0x1e0] sm:$0xff]
        %v271 = vld [vmem:[#allocation5 + $0x1e8] sm:$0xff]
        %v272 = vld [vmem:[#allocation5 + $0x1f0] sm:$0xff]
        %v273 = vld [vmem:[#allocation5 + $0x1f8] sm:$0xff]
        %v274 = vld [vmem:[#allocation5 + $0x200] sm:$0xff]
        %v275 = vld [vmem:[#allocation5 + $0x208] sm:$0xff]
        %v276 = vld [vmem:[#allocation5 + $0x210] sm:$0xff]
        %v277 = vld [vmem:[#allocation5 + $0x218] sm:$0xff]
        %v278 = vld [vmem:[#allocation5 + $0x220] sm:$0xff]
        %v279 = vld [vmem:[#allocation5 + $0x228] sm:$0xff]
        %v280 = vld [vmem:[#allocation5 + $0x230] sm:$0xff]
        %v281 = vld [vmem:[#allocation5 + $0x238] sm:$0xff]
        %v282 = vld [vmem:[#allocation5 + $0x240] sm:$0xff]
        %v283 = vld [vmem:[#allocation5 + $0x248] sm:$0xff]
        %v284 = vld [vmem:[#allocation5 + $0x250] sm:$0xff]
        %v285 = vld [vmem:[#allocation5 + $0x258] sm:$0xff]
        %v286 = vld [vmem:[#allocation5 + $0x260] sm:$0xff]
        %v287 = vld [vmem:[#allocation5 + $0x268] sm:$0xff]
        %v288 = vld [vmem:[#allocation5 + $0x270] sm:$0xff]
        %v289 = vld [vmem:[#allocation5 + $0x278] sm:$0xff]
        %v290 = vld [vmem:[#allocation5 + $0x280] sm:$0xff]
        %v291 = vld [vmem:[#allocation5 + $0x288] sm:$0xff]
        %v292 = vld [vmem:[#allocation5 + $0x290] sm:$0xff]
        %v293 = vld [vmem:[#allocation5 + $0x298] sm:$0xff]
        %v294 = vld [vmem:[#allocation5 + $0x2a0] sm:$0xff]
        %v295 = vld [vmem:[#allocation5 + $0x2a8] sm:$0xff]
        %v296 = vld [vmem:[#allocation5 + $0x2b0] sm:$0xff]
        %v297 = vld [vmem:[#allocation5 + $0x2b8] sm:$0xff]
        %v298 = vld [vmem:[#allocation5 + $0x2c0] sm:$0xff]
        %v299 = vld [vmem:[#allocation5 + $0x2c8] sm:$0xff]
        %v300 = vld [vmem:[#allocation5 + $0x2d0] sm:$0xff]
        %v301 = vld [vmem:[#allocation5 + $0x2d8] sm:$0xff]
        %v302 = vld [vmem:[#allocation5 + $0x2e0] sm:$0xff]
        %v303 = vld [vmem:[#allocation5 + $0x2e8] sm:$0xff]
        %v304 = vld [vmem:[#allocation5 + $0x2f0] sm:$0xff]
        %v305 = vld [vmem:[#allocation5 + $0x2f8] sm:$0xff]
        %v306 = vld [vmem:[#allocation5 + $0x300] sm:$0xff]
        %v307 = vld [vmem:[#allocation5 + $0x308] sm:$0xff]
        %v308 = vld [vmem:[#allocation5 + $0x310] sm:$0xff]
        %v309 = vld [vmem:[#allocation5 + $0x318] sm:$0xff]
        %v310 = vld [vmem:[#allocation5 + $0x320] sm:$0xff]
        %v311 = vld [vmem:[#allocation5 + $0x328] sm:$0xff]
        %v312 = vld [vmem:[#allocation5 + $0x330] sm:$0xff]
        %v313 = vld [vmem:[#allocation5 + $0x338] sm:$0xff]
        %v314 = vld [vmem:[#allocation5 + $0x340] sm:$0xff]
        %v315 = vld [vmem:[#allocation5 + $0x348] sm:$0xff]
        %v316 = vld [vmem:[#allocation5 + $0x350] sm:$0xff]
        %v317 = vld [vmem:[#allocation5 + $0x358] sm:$0xff]
        %v318 = vld [vmem:[#allocation5 + $0x360] sm:$0xff]
        %v319 = vld [vmem:[#allocation5 + $0x368] sm:$0xff]
        %v320 = vld [vmem:[#allocation5 + $0x370] sm:$0xff]
        %v321 = vld [vmem:[#allocation5 + $0x378] sm:$0xff]
        %v322 = vld [vmem:[#allocation5 + $0x380] sm:$0xff]
        %v323 = vld [vmem:[#allocation5 + $0x388] sm:$0xff]
        %v324 = vld [vmem:[#allocation5 + $0x390] sm:$0xff]
        %v325 = vld [vmem:[#allocation5 + $0x398] sm:$0xff]
        %v326 = vld [vmem:[#allocation5 + $0x3a0] sm:$0xff]
        %v327 = vld [vmem:[#allocation5 + $0x3a8] sm:$0xff]
        %v328 = vld [vmem:[#allocation5 + $0x3b0] sm:$0xff]
        %v329 = vld [vmem:[#allocation5 + $0x3b8] sm:$0xff]
        %v330 = vld [vmem:[#allocation5 + $0x3c0] sm:$0xff]
        %v331 = vld [vmem:[#allocation5 + $0x3c8] sm:$0xff]
        %v332 = vld [vmem:[#allocation5 + $0x3d0] sm:$0xff]
        %v333 = vld [vmem:[#allocation5 + $0x3d8] sm:$0xff]
        %v334 = vld [vmem:[#allocation5 + $0x3e0] sm:$0xff]
        %v335 = vld [vmem:[#allocation5 + $0x3e8] sm:$0xff]
        %v336 = vld [vmem:[#allocation5 + $0x3f0] sm:$0xff]
        %v337 = vld [vmem:[#allocation5 + $0x3f8] sm:$0xff]
        %v338 = vand.u32 %v241, 4294901760
        %339 = vmatprep.subr.mxu0 %v338
        %v340 = vand.u32 %v240, 4294901760
        %341 = vmatpush1.msra.mxu0 %v340
        %v342 = vand.u32 %v239, 4294901760
        %343 = vmatprep.subr.mxu0 %v342
        %v344 = vand.u32 %v238, 4294901760
        %345 = vmatpush1.msra.mxu0 %v344
        %v346 = vand.u32 %v237, 4294901760
        %347 = vmatprep.subr.mxu0 %v346
        %v348 = vand.u32 %v236, 4294901760
        %349 = vmatpush1.msra.mxu0 %v348
        %v350 = vand.u32 %v235, 4294901760
        %351 = vmatprep.subr.mxu0 %v350
        %v352 = vand.u32 %v234, 4294901760
        %353 = vmatpush1.msra.mxu0 %v352
        %v354 = vand.u32 %v233, 4294901760
        %355 = vmatprep.subr.mxu0 %v354
        %v356 = vand.u32 %v232, 4294901760
        %357 = vmatpush1.msra.mxu0 %v356
        %v358 = vand.u32 %v231, 4294901760
        %359 = vmatprep.subr.mxu0 %v358
        %v360 = vand.u32 %v230, 4294901760
        %361 = vmatpush1.msra.mxu0 %v360
        %v362 = vand.u32 %v229, 4294901760
        %363 = vmatprep.subr.mxu0 %v362
        %v364 = vand.u32 %v228, 4294901760
        %365 = vmatpush1.msra.mxu0 %v364
        %v366 = vand.u32 %v227, 4294901760
        %367 = vmatprep.subr.mxu0 %v366
        %v368 = vand.u32 %v226, 4294901760
        %369 = vmatpush1.msra.mxu0 %v368
        %v370 = vand.u32 %v225, 4294901760
        %371 = vmatprep.subr.mxu0 %v370
        %v372 = vand.u32 %v224, 4294901760
        %373 = vmatpush1.msra.mxu0 %v372
        %v374 = vand.u32 %v223, 4294901760
        %375 = vmatprep.subr.mxu0 %v374
        %v376 = vand.u32 %v222, 4294901760
        %377 = vmatpush1.msra.mxu0 %v376
        %v378 = vand.u32 %v221, 4294901760
        %379 = vmatprep.subr.mxu0 %v378
        %v380 = vand.u32 %v220, 4294901760
        %381 = vmatpush1.msra.mxu0 %v380
        %v382 = vand.u32 %v219, 4294901760
        %383 = vmatprep.subr.mxu0 %v382
        %v384 = vand.u32 %v218, 4294901760
        %385 = vmatpush1.msra.mxu0 %v384
        %v386 = vand.u32 %v217, 4294901760
        %387 = vmatprep.subr.mxu0 %v386
        %v388 = vand.u32 %v216, 4294901760
        %389 = vmatpush1.msra.mxu0 %v388
        %v390 = vand.u32 %v215, 4294901760
        %391 = vmatprep.subr.mxu0 %v390
        %v392 = vand.u32 %v214, 4294901760
        %393 = vmatpush1.msra.mxu0 %v392
        %v394 = vand.u32 %v213, 4294901760
        %395 = vmatprep.subr.mxu0 %v394
        %v396 = vand.u32 %v212, 4294901760
        %397 = vmatpush1.msra.mxu0 %v396
        %v398 = vand.u32 %v211, 4294901760
        %399 = vmatprep.subr.mxu0 %v398
        %v400 = vand.u32 %v210, 4294901760
        %401 = vmatpush1.msra.mxu0 %v400
        %v402 = vand.u32 %v273, 4294901760
        %403 = vmatprep.subr.mxu0 %v402
        %v404 = vand.u32 %v272, 4294901760
        %405 = vmatpush2.msra.mxu0 %v404
        %v406 = vand.u32 %v271, 4294901760
        %407 = vmatprep.subr.mxu0 %v406
        %v408 = vand.u32 %v270, 4294901760
        %409 = vmatpush2.msra.mxu0 %v408
        %v410 = vand.u32 %v269, 4294901760
        %411 = vmatprep.subr.mxu0 %v410
        %v412 = vand.u32 %v268, 4294901760
        %413 = vmatpush2.msra.mxu0 %v412
        %v414 = vand.u32 %v267, 4294901760
        %415 = vmatprep.subr.mxu0 %v414
        %v416 = vand.u32 %v266, 4294901760
        %417 = vmatpush2.msra.mxu0 %v416
        %v418 = vand.u32 %v265, 4294901760
        %419 = vmatprep.subr.mxu0 %v418
        %v420 = vand.u32 %v264, 4294901760
        %421 = vmatpush2.msra.mxu0 %v420
        %v422 = vand.u32 %v263, 4294901760
        %423 = vmatprep.subr.mxu0 %v422
        %v424 = vand.u32 %v262, 4294901760
        %425 = vmatpush2.msra.mxu0 %v424
        %v426 = vand.u32 %v261, 4294901760
        %427 = vmatprep.subr.mxu0 %v426
        %v428 = vand.u32 %v260, 4294901760
        %429 = vmatpush2.msra.mxu0 %v428
        %v430 = vand.u32 %v259, 4294901760
        %431 = vmatprep.subr.mxu0 %v430
        %v432 = vand.u32 %v258, 4294901760
        %433 = vmatpush2.msra.mxu0 %v432
        %v434 = vand.u32 %v257, 4294901760
        %435 = vmatprep.subr.mxu0 %v434
        %v436 = vand.u32 %v256, 4294901760
        %437 = vmatpush2.msra.mxu0 %v436
        %v438 = vand.u32 %v255, 4294901760
        %439 = vmatprep.subr.mxu0 %v438
        %v440 = vand.u32 %v254, 4294901760
        %441 = vmatpush2.msra.mxu0 %v440
        %v442 = vand.u32 %v253, 4294901760
        %443 = vmatprep.subr.mxu0 %v442
        %v444 = vand.u32 %v252, 4294901760
        %445 = vmatpush2.msra.mxu0 %v444
        %v446 = vand.u32 %v251, 4294901760
        %447 = vmatprep.subr.mxu0 %v446
        %v448 = vand.u32 %v250, 4294901760
        %449 = vmatpush2.msra.mxu0 %v448
        %v450 = vand.u32 %v249, 4294901760
        %451 = vmatprep.subr.mxu0 %v450
        %v452 = vand.u32 %v248, 4294901760
        %453 = vmatpush2.msra.mxu0 %v452
        %v454 = vand.u32 %v247, 4294901760
        %455 = vmatprep.subr.mxu0 %v454
        %v456 = vand.u32 %v246, 4294901760
        %457 = vmatpush2.msra.mxu0 %v456
        %v458 = vand.u32 %v245, 4294901760
        %459 = vmatprep.subr.mxu0 %v458
        %v460 = vand.u32 %v244, 4294901760
        %461 = vmatpush2.msra.mxu0 %v460
        %v462 = vand.u32 %v243, 4294901760
        %463 = vmatprep.subr.mxu0 %v462
        %v464 = vand.u32 %v242, 4294901760
        %465 = vmatpush2.msra.mxu0 %v464
        %v466 = vand.u32 %v195, 4294901760
        %v467 = vsub.f32 %v195, %v466
        %v468 = vand.u32 %v467, 4294901760
        %v469 = vsub.f32 %v467, %v468
        %v470 = vand.u32 %v469, 4294901760
        %471 = vmatprep.mubr.f32.mxu0 %v470
        %v472 = vand.u32 %v194, 4294901760
        %v473 = vsub.f32 %v194, %v472
        %v474 = vand.u32 %v473, 4294901760
        %v475 = vsub.f32 %v473, %v474
        %v476 = vand.u32 %v475, 4294901760
        %477 = vmatmul.mubr.f32.gmra.mxu0 %v476
        %v478 = vpop.f32.mrf.mxu0
        %v479 = vadd.f32 0.0, %v478
        %v480 = vpop.f32.mrf.mxu0
        %v481 = vadd.f32 0.0, %v480
        %482 = vdwg.mxu0
        %v483 = vand.u32 %v241, 4294901760
        %v484 = vsub.f32 %v241, %v483
        %v485 = vand.u32 %v484, 4294901760
        %v486 = vsub.f32 %v484, %v485
        %v487 = vand.u32 %v486, 4294901760
        %488 = vmatprep.subr.mxu0 %v487
        %v489 = vand.u32 %v240, 4294901760
        %v490 = vsub.f32 %v240, %v489
        %v491 = vand.u32 %v490, 4294901760
        %v492 = vsub.f32 %v490, %v491
        %v493 = vand.u32 %v492, 4294901760
        %494 = vmatpush1.msra.mxu0 %v493
        %v495 = vand.u32 %v239, 4294901760
        %v496 = vsub.f32 %v239, %v495
        %v497 = vand.u32 %v496, 4294901760
        %v498 = vsub.f32 %v496, %v497
        %v499 = vand.u32 %v498, 4294901760
        %500 = vmatprep.subr.mxu0 %v499
        %v501 = vand.u32 %v238, 4294901760
        %v502 = vsub.f32 %v238, %v501
        %v503 = vand.u32 %v502, 4294901760
        %v504 = vsub.f32 %v502, %v503
        %v505 = vand.u32 %v504, 4294901760
        %506 = vmatpush1.msra.mxu0 %v505
        %v507 = vand.u32 %v237, 4294901760
        %v508 = vsub.f32 %v237, %v507
        %v509 = vand.u32 %v508, 4294901760
        %v510 = vsub.f32 %v508, %v509
        %v511 = vand.u32 %v510, 4294901760
        %512 = vmatprep.subr.mxu0 %v511
        %v513 = vand.u32 %v236, 4294901760
        %v514 = vsub.f32 %v236, %v513
        %v515 = vand.u32 %v514, 4294901760
        %v516 = vsub.f32 %v514, %v515
        %v517 = vand.u32 %v516, 4294901760
        %518 = vmatpush1.msra.mxu0 %v517
        %v519 = vand.u32 %v235, 4294901760
        %v520 = vsub.f32 %v235, %v519
        %v521 = vand.u32 %v520, 4294901760
        %v522 = vsub.f32 %v520, %v521
        %v523 = vand.u32 %v522, 4294901760
        %524 = vmatprep.subr.mxu0 %v523
        %v525 = vand.u32 %v234, 4294901760
        %v526 = vsub.f32 %v234, %v525
        %v527 = vand.u32 %v526, 4294901760
        %v528 = vsub.f32 %v526, %v527
        %v529 = vand.u32 %v528, 4294901760
        %530 = vmatpush1.msra.mxu0 %v529
        %v531 = vand.u32 %v233, 4294901760
        %v532 = vsub.f32 %v233, %v531
        %v533 = vand.u32 %v532, 4294901760
        %v534 = vsub.f32 %v532, %v533
        %v535 = vand.u32 %v534, 4294901760
        %536 = vmatprep.subr.mxu0 %v535
        %v537 = vand.u32 %v232, 4294901760
        %v538 = vsub.f32 %v232, %v537
        %v539 = vand.u32 %v538, 4294901760
        %v540 = vsub.f32 %v538, %v539
        %v541 = vand.u32 %v540, 4294901760
        %542 = vmatpush1.msra.mxu0 %v541
        %v543 = vand.u32 %v231, 4294901760
        %v544 = vsub.f32 %v231, %v543
        %v545 = vand.u32 %v544, 4294901760
        %v546 = vsub.f32 %v544, %v545
        %v547 = vand.u32 %v546, 4294901760
        %548 = vmatprep.subr.mxu0 %v547
        %v549 = vand.u32 %v230, 4294901760
        %v550 = vsub.f32 %v230, %v549
        %v551 = vand.u32 %v550, 4294901760
        %v552 = vsub.f32 %v550, %v551
        %v553 = vand.u32 %v552, 4294901760
        %554 = vmatpush1.msra.mxu0 %v553
        %v555 = vand.u32 %v229, 4294901760
        %v556 = vsub.f32 %v229, %v555
        %v557 = vand.u32 %v556, 4294901760
        %v558 = vsub.f32 %v556, %v557
        %v559 = vand.u32 %v558, 4294901760
        %560 = vmatprep.subr.mxu0 %v559
        %v561 = vand.u32 %v228, 4294901760
        %v562 = vsub.f32 %v228, %v561
        %v563 = vand.u32 %v562, 4294901760
        %v564 = vsub.f32 %v562, %v563
        %v565 = vand.u32 %v564, 4294901760
        %566 = vmatpush1.msra.mxu0 %v565
        %v567 = vand.u32 %v227, 4294901760
        %v568 = vsub.f32 %v227, %v567
        %v569 = vand.u32 %v568, 4294901760
        %v570 = vsub.f32 %v568, %v569
        %v571 = vand.u32 %v570, 4294901760
        %572 = vmatprep.subr.mxu0 %v571
        %v573 = vand.u32 %v226, 4294901760
        %v574 = vsub.f32 %v226, %v573
        %v575 = vand.u32 %v574, 4294901760
        %v576 = vsub.f32 %v574, %v575
        %v577 = vand.u32 %v576, 4294901760
        %578 = vmatpush1.msra.mxu0 %v577
        %v579 = vand.u32 %v225, 4294901760
        %v580 = vsub.f32 %v225, %v579
        %v581 = vand.u32 %v580, 4294901760
        %v582 = vsub.f32 %v580, %v581
        %v583 = vand.u32 %v582, 4294901760
        %584 = vmatprep.subr.mxu0 %v583
        %v585 = vand.u32 %v224, 4294901760
        %v586 = vsub.f32 %v224, %v585
        %v587 = vand.u32 %v586, 4294901760
        %v588 = vsub.f32 %v586, %v587
        %v589 = vand.u32 %v588, 4294901760
        %590 = vmatpush1.msra.mxu0 %v589
        %v591 = vand.u32 %v223, 4294901760
        %v592 = vsub.f32 %v223, %v591
        %v593 = vand.u32 %v592, 4294901760
        %v594 = vsub.f32 %v592, %v593
        %v595 = vand.u32 %v594, 4294901760
        %596 = vmatprep.subr.mxu0 %v595
        %v597 = vand.u32 %v222, 4294901760
        %v598 = vsub.f32 %v222, %v597
        %v599 = vand.u32 %v598, 4294901760
        %v600 = vsub.f32 %v598, %v599
        %v601 = vand.u32 %v600, 4294901760
        %602 = vmatpush1.msra.mxu0 %v601
        %v603 = vand.u32 %v221, 4294901760
        %v604 = vsub.f32 %v221, %v603
        %v605 = vand.u32 %v604, 4294901760
        %v606 = vsub.f32 %v604, %v605
        %v607 = vand.u32 %v606, 4294901760
        %608 = vmatprep.subr.mxu0 %v607
        %v609 = vand.u32 %v220, 4294901760
        %v610 = vsub.f32 %v220, %v609
        %v611 = vand.u32 %v610, 4294901760
        %v612 = vsub.f32 %v610, %v611
        %v613 = vand.u32 %v612, 4294901760
        %614 = vmatpush1.msra.mxu0 %v613
        %v615 = vand.u32 %v219, 4294901760
        %v616 = vsub.f32 %v219, %v615
        %v617 = vand.u32 %v616, 4294901760
        %v618 = vsub.f32 %v616, %v617
        %v619 = vand.u32 %v618, 4294901760
        %620 = vmatprep.subr.mxu0 %v619
        %v621 = vand.u32 %v218, 4294901760
        %v622 = vsub.f32 %v218, %v621
        %v623 = vand.u32 %v622, 4294901760
        %v624 = vsub.f32 %v622, %v623
        %v625 = vand.u32 %v624, 4294901760
        %626 = vmatpush1.msra.mxu0 %v625
        %v627 = vand.u32 %v217, 4294901760
        %v628 = vsub.f32 %v217, %v627
        %v629 = vand.u32 %v628, 4294901760
        %v630 = vsub.f32 %v628, %v629
        %v631 = vand.u32 %v630, 4294901760
        %632 = vmatprep.subr.mxu0 %v631
        %v633 = vand.u32 %v216, 4294901760
        %v634 = vsub.f32 %v216, %v633
        %v635 = vand.u32 %v634, 4294901760
        %v636 = vsub.f32 %v634, %v635
        %v637 = vand.u32 %v636, 4294901760
        %638 = vmatpush1.msra.mxu0 %v637
        %v639 = vand.u32 %v215, 4294901760
        %v640 = vsub.f32 %v215, %v639
        %v641 = vand.u32 %v640, 4294901760
        %v642 = vsub.f32 %v640, %v641
        %v643 = vand.u32 %v642, 4294901760
        %644 = vmatprep.subr.mxu0 %v643
        %v645 = vand.u32 %v214, 4294901760
        %v646 = vsub.f32 %v214, %v645
        %v647 = vand.u32 %v646, 4294901760
        %v648 = vsub.f32 %v646, %v647
        %v649 = vand.u32 %v648, 4294901760
        %650 = vmatpush1.msra.mxu0 %v649
        %v651 = vand.u32 %v213, 4294901760
        %v652 = vsub.f32 %v213, %v651
        %v653 = vand.u32 %v652, 4294901760
        %v654 = vsub.f32 %v652, %v653
        %v655 = vand.u32 %v654, 4294901760
        %656 = vmatprep.subr.mxu0 %v655
        %v657 = vand.u32 %v212, 4294901760
        %v658 = vsub.f32 %v212, %v657
        %v659 = vand.u32 %v658, 4294901760
        %v660 = vsub.f32 %v658, %v659
        %v661 = vand.u32 %v660, 4294901760
        %662 = vmatpush1.msra.mxu0 %v661
        %v663 = vand.u32 %v211, 4294901760
        %v664 = vsub.f32 %v211, %v663
        %v665 = vand.u32 %v664, 4294901760
        %v666 = vsub.f32 %v664, %v665
        %v667 = vand.u32 %v666, 4294901760
        %668 = vmatprep.subr.mxu0 %v667
        %v669 = vand.u32 %v210, 4294901760
        %v670 = vsub.f32 %v210, %v669
        %v671 = vand.u32 %v670, 4294901760
        %v672 = vsub.f32 %v670, %v671
        %v673 = vand.u32 %v672, 4294901760
        %674 = vmatpush1.msra.mxu0 %v673
        %v675 = vand.u32 %v273, 4294901760
        %v676 = vsub.f32 %v273, %v675
        %v677 = vand.u32 %v676, 4294901760
        %v678 = vsub.f32 %v676, %v677
        %v679 = vand.u32 %v678, 4294901760
        %680 = vmatprep.subr.mxu0 %v679
        %v681 = vand.u32 %v272, 4294901760
        %v682 = vsub.f32 %v272, %v681
        %v683 = vand.u32 %v682, 4294901760
        %v684 = vsub.f32 %v682, %v683
        %v685 = vand.u32 %v684, 4294901760
        %686 = vmatpush2.msra.mxu0 %v685
        %v687 = vand.u32 %v271, 4294901760
        %v688 = vsub.f32 %v271, %v687
        %v689 = vand.u32 %v688, 4294901760
        %v690 = vsub.f32 %v688, %v689
        %v691 = vand.u32 %v690, 4294901760
        %692 = vmatprep.subr.mxu0 %v691
        %v693 = vand.u32 %v270, 4294901760
        %v694 = vsub.f32 %v270, %v693
        %v695 = vand.u32 %v694, 4294901760
        %v696 = vsub.f32 %v694, %v695
        %v697 = vand.u32 %v696, 4294901760
        %698 = vmatpush2.msra.mxu0 %v697
        %v699 = vand.u32 %v269, 4294901760
        %v700 = vsub.f32 %v269, %v699
        %v701 = vand.u32 %v700, 4294901760
        %v702 = vsub.f32 %v700, %v701
        %v703 = vand.u32 %v702, 4294901760
        %704 = vmatprep.subr.mxu0 %v703
        %v705 = vand.u32 %v268, 4294901760
        %v706 = vsub.f32 %v268, %v705
        %v707 = vand.u32 %v706, 4294901760
        %v708 = vsub.f32 %v706, %v707
        %v709 = vand.u32 %v708, 4294901760
        %710 = vmatpush2.msra.mxu0 %v709
        %v711 = vand.u32 %v267, 4294901760
        %v712 = vsub.f32 %v267, %v711
        %v713 = vand.u32 %v712, 4294901760
        %v714 = vsub.f32 %v712, %v713
        %v715 = vand.u32 %v714, 4294901760
        %716 = vmatprep.subr.mxu0 %v715
        %v717 = vand.u32 %v266, 4294901760
        %v718 = vsub.f32 %v266, %v717
        %v719 = vand.u32 %v718, 4294901760
        %v720 = vsub.f32 %v718, %v719
        %v721 = vand.u32 %v720, 4294901760
        %722 = vmatpush2.msra.mxu0 %v721
        %v723 = vand.u32 %v265, 4294901760
        %v724 = vsub.f32 %v265, %v723
        %v725 = vand.u32 %v724, 4294901760
        %v726 = vsub.f32 %v724, %v725
        %v727 = vand.u32 %v726, 4294901760
        %728 = vmatprep.subr.mxu0 %v727
        %v729 = vand.u32 %v264, 4294901760
        %v730 = vsub.f32 %v264, %v729
        %v731 = vand.u32 %v730, 4294901760
        %v732 = vsub.f32 %v730, %v731
        %v733 = vand.u32 %v732, 4294901760
        %734 = vmatpush2.msra.mxu0 %v733
        %v735 = vand.u32 %v263, 4294901760
        %v736 = vsub.f32 %v263, %v735
        %v737 = vand.u32 %v736, 4294901760
        %v738 = vsub.f32 %v736, %v737
        %v739 = vand.u32 %v738, 4294901760
        %740 = vmatprep.subr.mxu0 %v739
        %v741 = vand.u32 %v262, 4294901760
        %v742 = vsub.f32 %v262, %v741
        %v743 = vand.u32 %v742, 4294901760
        %v744 = vsub.f32 %v742, %v743
        %v745 = vand.u32 %v744, 4294901760
        %746 = vmatpush2.msra.mxu0 %v745
        %v747 = vand.u32 %v261, 4294901760
        %v748 = vsub.f32 %v261, %v747
        %v749 = vand.u32 %v748, 4294901760
        %v750 = vsub.f32 %v748, %v749
        %v751 = vand.u32 %v750, 4294901760
        %752 = vmatprep.subr.mxu0 %v751
        %v753 = vand.u32 %v260, 4294901760
        %v754 = vsub.f32 %v260, %v753
        %v755 = vand.u32 %v754, 4294901760
        %v756 = vsub.f32 %v754, %v755
        %v757 = vand.u32 %v756, 4294901760
        %758 = vmatpush2.msra.mxu0 %v757
        %v759 = vand.u32 %v259, 4294901760
        %v760 = vsub.f32 %v259, %v759
        %v761 = vand.u32 %v760, 4294901760
        %v762 = vsub.f32 %v760, %v761
        %v763 = vand.u32 %v762, 4294901760
        %764 = vmatprep.subr.mxu0 %v763
        %v765 = vand.u32 %v258, 4294901760
        %v766 = vsub.f32 %v258, %v765
        %v767 = vand.u32 %v766, 4294901760
        %v768 = vsub.f32 %v766, %v767
        %v769 = vand.u32 %v768, 4294901760
        %770 = vmatpush2.msra.mxu0 %v769
        %v771 = vand.u32 %v257, 4294901760
        %v772 = vsub.f32 %v257, %v771
        %v773 = vand.u32 %v772, 4294901760
        %v774 = vsub.f32 %v772, %v773
        %v775 = vand.u32 %v774, 4294901760
        %776 = vmatprep.subr.mxu0 %v775
        %v777 = vand.u32 %v256, 4294901760
        %v778 = vsub.f32 %v256, %v777
        %v779 = vand.u32 %v778, 4294901760
        %v780 = vsub.f32 %v778, %v779
        %v781 = vand.u32 %v780, 4294901760
        %782 = vmatpush2.msra.mxu0 %v781
        %v783 = vand.u32 %v255, 4294901760
        %v784 = vsub.f32 %v255, %v783
        %v785 = vand.u32 %v784, 4294901760
        %v786 = vsub.f32 %v784, %v785
        %v787 = vand.u32 %v786, 4294901760
        %788 = vmatprep.subr.mxu0 %v787
        %v789 = vand.u32 %v254, 4294901760
        %v790 = vsub.f32 %v254, %v789
        %v791 = vand.u32 %v790, 4294901760
        %v792 = vsub.f32 %v790, %v791
        %v793 = vand.u32 %v792, 4294901760
        %794 = vmatpush2.msra.mxu0 %v793
        %v795 = vand.u32 %v253, 4294901760
        %v796 = vsub.f32 %v253, %v795
        %v797 = vand.u32 %v796, 4294901760
        %v798 = vsub.f32 %v796, %v797
        %v799 = vand.u32 %v798, 4294901760
        %800 = vmatprep.subr.mxu0 %v799
        %v801 = vand.u32 %v252, 4294901760
        %v802 = vsub.f32 %v252, %v801
        %v803 = vand.u32 %v802, 4294901760
        %v804 = vsub.f32 %v802, %v803
        %v805 = vand.u32 %v804, 4294901760
        %806 = vmatpush2.msra.mxu0 %v805
        %v807 = vand.u32 %v251, 4294901760
        %v808 = vsub.f32 %v251, %v807
        %v809 = vand.u32 %v808, 4294901760
        %v810 = vsub.f32 %v808, %v809
        %v811 = vand.u32 %v810, 4294901760
        %812 = vmatprep.subr.mxu0 %v811
        %v813 = vand.u32 %v250, 4294901760
        %v814 = vsub.f32 %v250, %v813
        %v815 = vand.u32 %v814, 4294901760
        %v816 = vsub.f32 %v814, %v815
        %v817 = vand.u32 %v816, 4294901760
        %818 = vmatpush2.msra.mxu0 %v817
        %v819 = vand.u32 %v249, 4294901760
        %v820 = vsub.f32 %v249, %v819
        %v821 = vand.u32 %v820, 4294901760
        %v822 = vsub.f32 %v820, %v821
        %v823 = vand.u32 %v822, 4294901760
        %824 = vmatprep.subr.mxu0 %v823
        %v825 = vand.u32 %v248, 4294901760
        %v826 = vsub.f32 %v248, %v825
        %v827 = vand.u32 %v826, 4294901760
        %v828 = vsub.f32 %v826, %v827
        %v829 = vand.u32 %v828, 4294901760
        %830 = vmatpush2.msra.mxu0 %v829
        %v831 = vand.u32 %v247, 4294901760
        %v832 = vsub.f32 %v247, %v831
        %v833 = vand.u32 %v832, 4294901760
        %v834 = vsub.f32 %v832, %v833
        %v835 = vand.u32 %v834, 4294901760
        %836 = vmatprep.subr.mxu0 %v835
        %v837 = vand.u32 %v246, 4294901760
        %v838 = vsub.f32 %v246, %v837
        %v839 = vand.u32 %v838, 4294901760
        %v840 = vsub.f32 %v838, %v839
        %v841 = vand.u32 %v840, 4294901760
        %842 = vmatpush2.msra.mxu0 %v841
        %v843 = vand.u32 %v245, 4294901760
        %v844 = vsub.f32 %v245, %v843
        %v845 = vand.u32 %v844, 4294901760
        %v846 = vsub.f32 %v844, %v845
        %v847 = vand.u32 %v846, 4294901760
        %848 = vmatprep.subr.mxu0 %v847
        %v849 = vand.u32 %v244, 4294901760
        %v850 = vsub.f32 %v244, %v849
        %v851 = vand.u32 %v850, 4294901760
        %v852 = vsub.f32 %v850, %v851
        %v853 = vand.u32 %v852, 4294901760
        %854 = vmatpush2.msra.mxu0 %v853
        %v855 = vand.u32 %v243, 4294901760
        %v856 = vsub.f32 %v243, %v855
        %v857 = vand.u32 %v856, 4294901760
        %v858 = vsub.f32 %v856, %v857
        %v859 = vand.u32 %v858, 4294901760
        %860 = vmatprep.subr.mxu0 %v859
        %v861 = vand.u32 %v242, 4294901760
        %v862 = vsub.f32 %v242, %v861
        %v863 = vand.u32 %v862, 4294901760
        %v864 = vsub.f32 %v862, %v863
        %v865 = vand.u32 %v864, 4294901760
        %866 = vmatpush2.msra.mxu0 %v865
        %v867 = vand.u32 %v195, 4294901760
        %868 = vmatprep.mubr.f32.mxu0 %v867
        %v869 = vand.u32 %v194, 4294901760
        %870 = vmatmul.mubr.f32.gmra.mxu0 %v869
        %v871 = vpop.f32.mrf.mxu0
        %v872 = vadd.f32 %v479, %v871
        %v873 = vpop.f32.mrf.mxu0
        %v874 = vadd.f32 %v481, %v873
        %875 = vdwg.mxu0
        %v876 = vand.u32 %v241, 4294901760
        %v877 = vsub.f32 %v241, %v876
        %878 = vmatprep.subr.mxu0 %v877
        %v879 = vand.u32 %v240, 4294901760
        %v880 = vsub.f32 %v240, %v879
        %881 = vmatpush1.msra.mxu0 %v880
        %v882 = vand.u32 %v239, 4294901760
        %v883 = vsub.f32 %v239, %v882
        %884 = vmatprep.subr.mxu0 %v883
        %v885 = vand.u32 %v238, 4294901760
        %v886 = vsub.f32 %v238, %v885
        %887 = vmatpush1.msra.mxu0 %v886
        %v888 = vand.u32 %v237, 4294901760
        %v889 = vsub.f32 %v237, %v888
        %890 = vmatprep.subr.mxu0 %v889
        %v891 = vand.u32 %v236, 4294901760
        %v892 = vsub.f32 %v236, %v891
        %893 = vmatpush1.msra.mxu0 %v892
        %v894 = vand.u32 %v235, 4294901760
        %v895 = vsub.f32 %v235, %v894
        %896 = vmatprep.subr.mxu0 %v895
        %v897 = vand.u32 %v234, 4294901760
        %v898 = vsub.f32 %v234, %v897
        %899 = vmatpush1.msra.mxu0 %v898
        %v900 = vand.u32 %v233, 4294901760
        %v901 = vsub.f32 %v233, %v900
        %902 = vmatprep.subr.mxu0 %v901
        %v903 = vand.u32 %v232, 4294901760
        %v904 = vsub.f32 %v232, %v903
        %905 = vmatpush1.msra.mxu0 %v904
        %v906 = vand.u32 %v231, 4294901760
        %v907 = vsub.f32 %v231, %v906
        %908 = vmatprep.subr.mxu0 %v907
        %v909 = vand.u32 %v230, 4294901760
        %v910 = vsub.f32 %v230, %v909
        %911 = vmatpush1.msra.mxu0 %v910
        %v912 = vand.u32 %v229, 4294901760
        %v913 = vsub.f32 %v229, %v912
        %914 = vmatprep.subr.mxu0 %v913
        %v915 = vand.u32 %v228, 4294901760
        %v916 = vsub.f32 %v228, %v915
        %917 = vmatpush1.msra.mxu0 %v916
        %v918 = vand.u32 %v227, 4294901760
        %v919 = vsub.f32 %v227, %v918
        %920 = vmatprep.subr.mxu0 %v919
        %v921 = vand.u32 %v226, 4294901760
        %v922 = vsub.f32 %v226, %v921
        %923 = vmatpush1.msra.mxu0 %v922
        %v924 = vand.u32 %v225, 4294901760
        %v925 = vsub.f32 %v225, %v924
        %926 = vmatprep.subr.mxu0 %v925
        %v927 = vand.u32 %v224, 4294901760
        %v928 = vsub.f32 %v224, %v927
        %929 = vmatpush1.msra.mxu0 %v928
        %v930 = vand.u32 %v223, 4294901760
        %v931 = vsub.f32 %v223, %v930
        %932 = vmatprep.subr.mxu0 %v931
        %v933 = vand.u32 %v222, 4294901760
        %v934 = vsub.f32 %v222, %v933
        %935 = vmatpush1.msra.mxu0 %v934
        %v936 = vand.u32 %v221, 4294901760
        %v937 = vsub.f32 %v221, %v936
        %938 = vmatprep.subr.mxu0 %v937
        %v939 = vand.u32 %v220, 4294901760
        %v940 = vsub.f32 %v220, %v939
        %941 = vmatpush1.msra.mxu0 %v940
        %v942 = vand.u32 %v219, 4294901760
        %v943 = vsub.f32 %v219, %v942
        %944 = vmatprep.subr.mxu0 %v943
        %v945 = vand.u32 %v218, 4294901760
        %v946 = vsub.f32 %v218, %v945
        %947 = vmatpush1.msra.mxu0 %v946
        %v948 = vand.u32 %v217, 4294901760
        %v949 = vsub.f32 %v217, %v948
        %950 = vmatprep.subr.mxu0 %v949
        %v951 = vand.u32 %v216, 4294901760
        %v952 = vsub.f32 %v216, %v951
        %953 = vmatpush1.msra.mxu0 %v952
        %v954 = vand.u32 %v215, 4294901760
        %v955 = vsub.f32 %v215, %v954
        %956 = vmatprep.subr.mxu0 %v955
        %v957 = vand.u32 %v214, 4294901760
        %v958 = vsub.f32 %v214, %v957
        %959 = vmatpush1.msra.mxu0 %v958
        %v960 = vand.u32 %v213, 4294901760
        %v961 = vsub.f32 %v213, %v960
        %962 = vmatprep.subr.mxu0 %v961
        %v963 = vand.u32 %v212, 4294901760
        %v964 = vsub.f32 %v212, %v963
        %965 = vmatpush1.msra.mxu0 %v964
        %v966 = vand.u32 %v211, 4294901760
        %v967 = vsub.f32 %v211, %v966
        %968 = vmatprep.subr.mxu0 %v967
        %v969 = vand.u32 %v210, 4294901760
        %v970 = vsub.f32 %v210, %v969
        %971 = vmatpush1.msra.mxu0 %v970
        %v972 = vand.u32 %v273, 4294901760
        %v973 = vsub.f32 %v273, %v972
        %974 = vmatprep.subr.mxu0 %v973
        %v975 = vand.u32 %v272, 4294901760
        %v976 = vsub.f32 %v272, %v975
        %977 = vmatpush2.msra.mxu0 %v976
        %v978 = vand.u32 %v271, 4294901760
        %v979 = vsub.f32 %v271, %v978
        %980 = vmatprep.subr.mxu0 %v979
        %v981 = vand.u32 %v270, 4294901760
        %v982 = vsub.f32 %v270, %v981
        %983 = vmatpush2.msra.mxu0 %v982
        %v984 = vand.u32 %v269, 4294901760
        %v985 = vsub.f32 %v269, %v984
        %986 = vmatprep.subr.mxu0 %v985
        %v987 = vand.u32 %v268, 4294901760
        %v988 = vsub.f32 %v268, %v987
        %989 = vmatpush2.msra.mxu0 %v988
        %v990 = vand.u32 %v267, 4294901760
        %v991 = vsub.f32 %v267, %v990
        %992 = vmatprep.subr.mxu0 %v991
        %v993 = vand.u32 %v266, 4294901760
        %v994 = vsub.f32 %v266, %v993
        %995 = vmatpush2.msra.mxu0 %v994
        %v996 = vand.u32 %v265, 4294901760
        %v997 = vsub.f32 %v265, %v996
        %998 = vmatprep.subr.mxu0 %v997
        %v999 = vand.u32 %v264, 4294901760
        %v1000 = vsub.f32 %v264, %v999
        %1001 = vmatpush2.msra.mxu0 %v1000
        %v1002 = vand.u32 %v263, 4294901760
        %v1003 = vsub.f32 %v263, %v1002
        %1004 = vmatprep.subr.mxu0 %v1003
        %v1005 = vand.u32 %v262, 4294901760
        %v1006 = vsub.f32 %v262, %v1005
        %1007 = vmatpush2.msra.mxu0 %v1006
        %v1008 = vand.u32 %v261, 4294901760
        %v1009 = vsub.f32 %v261, %v1008
        %1010 = vmatprep.subr.mxu0 %v1009
        %v1011 = vand.u32 %v260, 4294901760
        %v1012 = vsub.f32 %v260, %v1011
        %1013 = vmatpush2.msra.mxu0 %v1012
        %v1014 = vand.u32 %v259, 4294901760
        %v1015 = vsub.f32 %v259, %v1014
        %1016 = vmatprep.subr.mxu0 %v1015
        %v1017 = vand.u32 %v258, 4294901760
        %v1018 = vsub.f32 %v258, %v1017
        %1019 = vmatpush2.msra.mxu0 %v1018
        %v1020 = vand.u32 %v257, 4294901760
        %v1021 = vsub.f32 %v257, %v1020
        %1022 = vmatprep.subr.mxu0 %v1021
        %v1023 = vand.u32 %v256, 4294901760
        %v1024 = vsub.f32 %v256, %v1023
        %1025 = vmatpush2.msra.mxu0 %v1024
        %v1026 = vand.u32 %v255, 4294901760
        %v1027 = vsub.f32 %v255, %v1026
        %1028 = vmatprep.subr.mxu0 %v1027
        %v1029 = vand.u32 %v254, 4294901760
        %v1030 = vsub.f32 %v254, %v1029
        %1031 = vmatpush2.msra.mxu0 %v1030
        %v1032 = vand.u32 %v253, 4294901760
        %v1033 = vsub.f32 %v253, %v1032
        %1034 = vmatprep.subr.mxu0 %v1033
        %v1035 = vand.u32 %v252, 4294901760
        %v1036 = vsub.f32 %v252, %v1035
        %1037 = vmatpush2.msra.mxu0 %v1036
        %v1038 = vand.u32 %v251, 4294901760
        %v1039 = vsub.f32 %v251, %v1038
        %1040 = vmatprep.subr.mxu0 %v1039
        %v1041 = vand.u32 %v250, 4294901760
        %v1042 = vsub.f32 %v250, %v1041
        %1043 = vmatpush2.msra.mxu0 %v1042
        %v1044 = vand.u32 %v249, 4294901760
        %v1045 = vsub.f32 %v249, %v1044
        %1046 = vmatprep.subr.mxu0 %v1045
        %v1047 = vand.u32 %v248, 4294901760
        %v1048 = vsub.f32 %v248, %v1047
        %1049 = vmatpush2.msra.mxu0 %v1048
        %v1050 = vand.u32 %v247, 4294901760
        %v1051 = vsub.f32 %v247, %v1050
        %1052 = vmatprep.subr.mxu0 %v1051
        %v1053 = vand.u32 %v246, 4294901760
        %v1054 = vsub.f32 %v246, %v1053
        %1055 = vmatpush2.msra.mxu0 %v1054
        %v1056 = vand.u32 %v245, 4294901760
        %v1057 = vsub.f32 %v245, %v1056
        %1058 = vmatprep.subr.mxu0 %v1057
        %v1059 = vand.u32 %v244, 4294901760
        %v1060 = vsub.f32 %v244, %v1059
        %1061 = vmatpush2.msra.mxu0 %v1060
        %v1062 = vand.u32 %v243, 4294901760
        %v1063 = vsub.f32 %v243, %v1062
        %1064 = vmatprep.subr.mxu0 %v1063
        %v1065 = vand.u32 %v242, 4294901760
        %v1066 = vsub.f32 %v242, %v1065
        %1067 = vmatpush2.msra.mxu0 %v1066
        %v1068 = vand.u32 %v195, 4294901760
        %v1069 = vsub.f32 %v195, %v1068
        %1070 = vmatprep.mubr.f32.mxu0 %v1069
        %v1071 = vand.u32 %v194, 4294901760
        %v1072 = vsub.f32 %v194, %v1071
        %1073 = vmatmul.mubr.f32.gmra.mxu0 %v1072
        %v1074 = vpop.f32.mrf.mxu0
        %v1075 = vadd.f32 %v872, %v1074
        %v1076 = vpop.f32.mrf.mxu0
        %v1077 = vadd.f32 %v874, %v1076
        %1078 = vdwg.mxu0
        %v1079 = vand.u32 %v241, 4294901760
        %1080 = vmatprep.subr.mxu0 %v1079
        %v1081 = vand.u32 %v240, 4294901760
        %1082 = vmatpush1.msra.mxu0 %v1081
        %v1083 = vand.u32 %v239, 4294901760
        %1084 = vmatprep.subr.mxu0 %v1083
        %v1085 = vand.u32 %v238, 4294901760
        %1086 = vmatpush1.msra.mxu0 %v1085
        %v1087 = vand.u32 %v237, 4294901760
        %1088 = vmatprep.subr.mxu0 %v1087
        %v1089 = vand.u32 %v236, 4294901760
        %1090 = vmatpush1.msra.mxu0 %v1089
        %v1091 = vand.u32 %v235, 4294901760
        %1092 = vmatprep.subr.mxu0 %v1091
        %v1093 = vand.u32 %v234, 4294901760
        %1094 = vmatpush1.msra.mxu0 %v1093
        %v1095 = vand.u32 %v233, 4294901760
        %1096 = vmatprep.subr.mxu0 %v1095
        %v1097 = vand.u32 %v232, 4294901760
        %1098 = vmatpush1.msra.mxu0 %v1097
        %v1099 = vand.u32 %v231, 4294901760
        %1100 = vmatprep.subr.mxu0 %v1099
        %v1101 = vand.u32 %v230, 4294901760
        %1102 = vmatpush1.msra.mxu0 %v1101
        %v1103 = vand.u32 %v229, 4294901760
        %1104 = vmatprep.subr.mxu0 %v1103
        %v1105 = vand.u32 %v228, 4294901760
        %1106 = vmatpush1.msra.mxu0 %v1105
        %v1107 = vand.u32 %v227, 4294901760
        %1108 = vmatprep.subr.mxu0 %v1107
        %v1109 = vand.u32 %v226, 4294901760
        %1110 = vmatpush1.msra.mxu0 %v1109
        %v1111 = vand.u32 %v225, 4294901760
        %1112 = vmatprep.subr.mxu0 %v1111
        %v1113 = vand.u32 %v224, 4294901760
        %1114 = vmatpush1.msra.mxu0 %v1113
        %v1115 = vand.u32 %v223, 4294901760
        %1116 = vmatprep.subr.mxu0 %v1115
        %v1117 = vand.u32 %v222, 4294901760
        %1118 = vmatpush1.msra.mxu0 %v1117
        %v1119 = vand.u32 %v221, 4294901760
        %1120 = vmatprep.subr.mxu0 %v1119
        %v1121 = vand.u32 %v220, 4294901760
        %1122 = vmatpush1.msra.mxu0 %v1121
        %v1123 = vand.u32 %v219, 4294901760
        %1124 = vmatprep.subr.mxu0 %v1123
        %v1125 = vand.u32 %v218, 4294901760
        %1126 = vmatpush1.msra.mxu0 %v1125
        %v1127 = vand.u32 %v217, 4294901760
        %1128 = vmatprep.subr.mxu0 %v1127
        %v1129 = vand.u32 %v216, 4294901760
        %1130 = vmatpush1.msra.mxu0 %v1129
        %v1131 = vand.u32 %v215, 4294901760
        %1132 = vmatprep.subr.mxu0 %v1131
        %v1133 = vand.u32 %v214, 4294901760
        %1134 = vmatpush1.msra.mxu0 %v1133
        %v1135 = vand.u32 %v213, 4294901760
        %1136 = vmatprep.subr.mxu0 %v1135
        %v1137 = vand.u32 %v212, 4294901760
        %1138 = vmatpush1.msra.mxu0 %v1137
        %v1139 = vand.u32 %v211, 4294901760
        %1140 = vmatprep.subr.mxu0 %v1139
        %v1141 = vand.u32 %v210, 4294901760
        %1142 = vmatpush1.msra.mxu0 %v1141
        %v1143 = vand.u32 %v273, 4294901760
        %1144 = vmatprep.subr.mxu0 %v1143
        %v1145 = vand.u32 %v272, 4294901760
        %1146 = vmatpush2.msra.mxu0 %v1145
        %v1147 = vand.u32 %v271, 4294901760
        %1148 = vmatprep.subr.mxu0 %v1147
        %v1149 = vand.u32 %v270, 4294901760
        %1150 = vmatpush2.msra.mxu0 %v1149
        %v1151 = vand.u32 %v269, 4294901760
        %1152 = vmatprep.subr.mxu0 %v1151
        %v1153 = vand.u32 %v268, 4294901760
        %1154 = vmatpush2.msra.mxu0 %v1153
        %v1155 = vand.u32 %v267, 4294901760
        %1156 = vmatprep.subr.mxu0 %v1155
        %v1157 = vand.u32 %v266, 4294901760
        %1158 = vmatpush2.msra.mxu0 %v1157
        %v1159 = vand.u32 %v265, 4294901760
        %1160 = vmatprep.subr.mxu0 %v1159
        %v1161 = vand.u32 %v264, 4294901760
        %1162 = vmatpush2.msra.mxu0 %v1161
        %v1163 = vand.u32 %v263, 4294901760
        %1164 = vmatprep.subr.mxu0 %v1163
        %v1165 = vand.u32 %v262, 4294901760
        %1166 = vmatpush2.msra.mxu0 %v1165
        %v1167 = vand.u32 %v261, 4294901760
        %1168 = vmatprep.subr.mxu0 %v1167
        %v1169 = vand.u32 %v260, 4294901760
        %1170 = vmatpush2.msra.mxu0 %v1169
        %v1171 = vand.u32 %v259, 4294901760
        %1172 = vmatprep.subr.mxu0 %v1171
        %v1173 = vand.u32 %v258, 4294901760
        %1174 = vmatpush2.msra.mxu0 %v1173
        %v1175 = vand.u32 %v257, 4294901760
        %1176 = vmatprep.subr.mxu0 %v1175
        %v1177 = vand.u32 %v256, 4294901760
        %1178 = vmatpush2.msra.mxu0 %v1177
        %v1179 = vand.u32 %v255, 4294901760
        %1180 = vmatprep.subr.mxu0 %v1179
        %v1181 = vand.u32 %v254, 4294901760
        %1182 = vmatpush2.msra.mxu0 %v1181
        %v1183 = vand.u32 %v253, 4294901760
        %1184 = vmatprep.subr.mxu0 %v1183
        %v1185 = vand.u32 %v252, 4294901760
        %1186 = vmatpush2.msra.mxu0 %v1185
        %v1187 = vand.u32 %v251, 4294901760
        %1188 = vmatprep.subr.mxu0 %v1187
        %v1189 = vand.u32 %v250, 4294901760
        %1190 = vmatpush2.msra.mxu0 %v1189
        %v1191 = vand.u32 %v249, 4294901760
        %1192 = vmatprep.subr.mxu0 %v1191
        %v1193 = vand.u32 %v248, 4294901760
        %1194 = vmatpush2.msra.mxu0 %v1193
        %v1195 = vand.u32 %v247, 4294901760
        %1196 = vmatprep.subr.mxu0 %v1195
        %v1197 = vand.u32 %v246, 4294901760
        %1198 = vmatpush2.msra.mxu0 %v1197
        %v1199 = vand.u32 %v245, 4294901760
        %1200 = vmatprep.subr.mxu0 %v1199
        %v1201 = vand.u32 %v244, 4294901760
        %1202 = vmatpush2.msra.mxu0 %v1201
        %v1203 = vand.u32 %v243, 4294901760
        %1204 = vmatprep.subr.mxu0 %v1203
        %v1205 = vand.u32 %v242, 4294901760
        %1206 = vmatpush2.msra.mxu0 %v1205
        %v1207 = vand.u32 %v195, 4294901760
        %v1208 = vsub.f32 %v195, %v1207
        %v1209 = vand.u32 %v1208, 4294901760
        %1210 = vmatprep.mubr.f32.mxu0 %v1209
        %v1211 = vand.u32 %v194, 4294901760
        %v1212 = vsub.f32 %v194, %v1211
        %v1213 = vand.u32 %v1212, 4294901760
        %1214 = vmatmul.mubr.f32.gmra.mxu0 %v1213
        %v1215 = vpop.f32.mrf.mxu0
        %v1216 = vadd.f32 %v1075, %v1215
        %v1217 = vpop.f32.mrf.mxu0
        %v1218 = vadd.f32 %v1077, %v1217
        %1219 = vdwg.mxu0
        %v1220 = vand.u32 %v241, 4294901760
        %v1221 = vsub.f32 %v241, %v1220
        %v1222 = vand.u32 %v1221, 4294901760
        %1223 = vmatprep.subr.mxu0 %v1222
        %v1224 = vand.u32 %v240, 4294901760
        %v1225 = vsub.f32 %v240, %v1224
        %v1226 = vand.u32 %v1225, 4294901760
        %1227 = vmatpush1.msra.mxu0 %v1226
        %v1228 = vand.u32 %v239, 4294901760
        %v1229 = vsub.f32 %v239, %v1228
        %v1230 = vand.u32 %v1229, 4294901760
        %1231 = vmatprep.subr.mxu0 %v1230
        %v1232 = vand.u32 %v238, 4294901760
        %v1233 = vsub.f32 %v238, %v1232
        %v1234 = vand.u32 %v1233, 4294901760
        %1235 = vmatpush1.msra.mxu0 %v1234
        %v1236 = vand.u32 %v237, 4294901760
        %v1237 = vsub.f32 %v237, %v1236
        %v1238 = vand.u32 %v1237, 4294901760
        %1239 = vmatprep.subr.mxu0 %v1238
        %v1240 = vand.u32 %v236, 4294901760
        %v1241 = vsub.f32 %v236, %v1240
        %v1242 = vand.u32 %v1241, 4294901760
        %1243 = vmatpush1.msra.mxu0 %v1242
        %v1244 = vand.u32 %v235, 4294901760
        %v1245 = vsub.f32 %v235, %v1244
        %v1246 = vand.u32 %v1245, 4294901760
        %1247 = vmatprep.subr.mxu0 %v1246
        %v1248 = vand.u32 %v234, 4294901760
        %v1249 = vsub.f32 %v234, %v1248
        %v1250 = vand.u32 %v1249, 4294901760
        %1251 = vmatpush1.msra.mxu0 %v1250
        %v1252 = vand.u32 %v233, 4294901760
        %v1253 = vsub.f32 %v233, %v1252
        %v1254 = vand.u32 %v1253, 4294901760
        %1255 = vmatprep.subr.mxu0 %v1254
        %v1256 = vand.u32 %v232, 4294901760
        %v1257 = vsub.f32 %v232, %v1256
        %v1258 = vand.u32 %v1257, 4294901760
        %1259 = vmatpush1.msra.mxu0 %v1258
        %v1260 = vand.u32 %v231, 4294901760
        %v1261 = vsub.f32 %v231, %v1260
        %v1262 = vand.u32 %v1261, 4294901760
        %1263 = vmatprep.subr.mxu0 %v1262
        %v1264 = vand.u32 %v230, 4294901760
        %v1265 = vsub.f32 %v230, %v1264
        %v1266 = vand.u32 %v1265, 4294901760
        %1267 = vmatpush1.msra.mxu0 %v1266
        %v1268 = vand.u32 %v229, 4294901760
        %v1269 = vsub.f32 %v229, %v1268
        %v1270 = vand.u32 %v1269, 4294901760
        %1271 = vmatprep.subr.mxu0 %v1270
        %v1272 = vand.u32 %v228, 4294901760
        %v1273 = vsub.f32 %v228, %v1272
        %v1274 = vand.u32 %v1273, 4294901760
        %1275 = vmatpush1.msra.mxu0 %v1274
        %v1276 = vand.u32 %v227, 4294901760
        %v1277 = vsub.f32 %v227, %v1276
        %v1278 = vand.u32 %v1277, 4294901760
        %1279 = vmatprep.subr.mxu0 %v1278
        %v1280 = vand.u32 %v226, 4294901760
        %v1281 = vsub.f32 %v226, %v1280
        %v1282 = vand.u32 %v1281, 4294901760
        %1283 = vmatpush1.msra.mxu0 %v1282
        %v1284 = vand.u32 %v225, 4294901760
        %v1285 = vsub.f32 %v225, %v1284
        %v1286 = vand.u32 %v1285, 4294901760
        %1287 = vmatprep.subr.mxu0 %v1286
        %v1288 = vand.u32 %v224, 4294901760
        %v1289 = vsub.f32 %v224, %v1288
        %v1290 = vand.u32 %v1289, 4294901760
        %1291 = vmatpush1.msra.mxu0 %v1290
        %v1292 = vand.u32 %v223, 4294901760
        %v1293 = vsub.f32 %v223, %v1292
        %v1294 = vand.u32 %v1293, 4294901760
        %1295 = vmatprep.subr.mxu0 %v1294
        %v1296 = vand.u32 %v222, 4294901760
        %v1297 = vsub.f32 %v222, %v1296
        %v1298 = vand.u32 %v1297, 4294901760
        %1299 = vmatpush1.msra.mxu0 %v1298
        %v1300 = vand.u32 %v221, 4294901760
        %v1301 = vsub.f32 %v221, %v1300
        %v1302 = vand.u32 %v1301, 4294901760
        %1303 = vmatprep.subr.mxu0 %v1302
        %v1304 = vand.u32 %v220, 4294901760
        %v1305 = vsub.f32 %v220, %v1304
        %v1306 = vand.u32 %v1305, 4294901760
        %1307 = vmatpush1.msra.mxu0 %v1306
        %v1308 = vand.u32 %v219, 4294901760
        %v1309 = vsub.f32 %v219, %v1308
        %v1310 = vand.u32 %v1309, 4294901760
        %1311 = vmatprep.subr.mxu0 %v1310
        %v1312 = vand.u32 %v218, 4294901760
        %v1313 = vsub.f32 %v218, %v1312
        %v1314 = vand.u32 %v1313, 4294901760
        %1315 = vmatpush1.msra.mxu0 %v1314
        %v1316 = vand.u32 %v217, 4294901760
        %v1317 = vsub.f32 %v217, %v1316
        %v1318 = vand.u32 %v1317, 4294901760
        %1319 = vmatprep.subr.mxu0 %v1318
        %v1320 = vand.u32 %v216, 4294901760
        %v1321 = vsub.f32 %v216, %v1320
        %v1322 = vand.u32 %v1321, 4294901760
        %1323 = vmatpush1.msra.mxu0 %v1322
        %v1324 = vand.u32 %v215, 4294901760
        %v1325 = vsub.f32 %v215, %v1324
        %v1326 = vand.u32 %v1325, 4294901760
        %1327 = vmatprep.subr.mxu0 %v1326
        %v1328 = vand.u32 %v214, 4294901760
        %v1329 = vsub.f32 %v214, %v1328
        %v1330 = vand.u32 %v1329, 4294901760
        %1331 = vmatpush1.msra.mxu0 %v1330
        %v1332 = vand.u32 %v213, 4294901760
        %v1333 = vsub.f32 %v213, %v1332
        %v1334 = vand.u32 %v1333, 4294901760
        %1335 = vmatprep.subr.mxu0 %v1334
        %v1336 = vand.u32 %v212, 4294901760
        %v1337 = vsub.f32 %v212, %v1336
        %v1338 = vand.u32 %v1337, 4294901760
        %1339 = vmatpush1.msra.mxu0 %v1338
        %v1340 = vand.u32 %v211, 4294901760
        %v1341 = vsub.f32 %v211, %v1340
        %v1342 = vand.u32 %v1341, 4294901760
        %1343 = vmatprep.subr.mxu0 %v1342
        %v1344 = vand.u32 %v210, 4294901760
        %v1345 = vsub.f32 %v210, %v1344
        %v1346 = vand.u32 %v1345, 4294901760
        %1347 = vmatpush1.msra.mxu0 %v1346
        %v1348 = vand.u32 %v273, 4294901760
        %v1349 = vsub.f32 %v273, %v1348
        %v1350 = vand.u32 %v1349, 4294901760
        %1351 = vmatprep.subr.mxu0 %v1350
        %v1352 = vand.u32 %v272, 4294901760
        %v1353 = vsub.f32 %v272, %v1352
        %v1354 = vand.u32 %v1353, 4294901760
        %1355 = vmatpush2.msra.mxu0 %v1354
        %v1356 = vand.u32 %v271, 4294901760
        %v1357 = vsub.f32 %v271, %v1356
        %v1358 = vand.u32 %v1357, 4294901760
        %1359 = vmatprep.subr.mxu0 %v1358
        %v1360 = vand.u32 %v270, 4294901760
        %v1361 = vsub.f32 %v270, %v1360
        %v1362 = vand.u32 %v1361, 4294901760
        %1363 = vmatpush2.msra.mxu0 %v1362
        %v1364 = vand.u32 %v269, 4294901760
        %v1365 = vsub.f32 %v269, %v1364
        %v1366 = vand.u32 %v1365, 4294901760
        %1367 = vmatprep.subr.mxu0 %v1366
        %v1368 = vand.u32 %v268, 4294901760
        %v1369 = vsub.f32 %v268, %v1368
        %v1370 = vand.u32 %v1369, 4294901760
        %1371 = vmatpush2.msra.mxu0 %v1370
        %v1372 = vand.u32 %v267, 4294901760
        %v1373 = vsub.f32 %v267, %v1372
        %v1374 = vand.u32 %v1373, 4294901760
        %1375 = vmatprep.subr.mxu0 %v1374
        %v1376 = vand.u32 %v266, 4294901760
        %v1377 = vsub.f32 %v266, %v1376
        %v1378 = vand.u32 %v1377, 4294901760
        %1379 = vmatpush2.msra.mxu0 %v1378
        %v1380 = vand.u32 %v265, 4294901760
        %v1381 = vsub.f32 %v265, %v1380
        %v1382 = vand.u32 %v1381, 4294901760
        %1383 = vmatprep.subr.mxu0 %v1382
        %v1384 = vand.u32 %v264, 4294901760
        %v1385 = vsub.f32 %v264, %v1384
        %v1386 = vand.u32 %v1385, 4294901760
        %1387 = vmatpush2.msra.mxu0 %v1386
        %v1388 = vand.u32 %v263, 4294901760
        %v1389 = vsub.f32 %v263, %v1388
        %v1390 = vand.u32 %v1389, 4294901760
        %1391 = vmatprep.subr.mxu0 %v1390
        %v1392 = vand.u32 %v262, 4294901760
        %v1393 = vsub.f32 %v262, %v1392
        %v1394 = vand.u32 %v1393, 4294901760
        %1395 = vmatpush2.msra.mxu0 %v1394
        %v1396 = vand.u32 %v261, 4294901760
        %v1397 = vsub.f32 %v261, %v1396
        %v1398 = vand.u32 %v1397, 4294901760
        %1399 = vmatprep.subr.mxu0 %v1398
        %v1400 = vand.u32 %v260, 4294901760
        %v1401 = vsub.f32 %v260, %v1400
        %v1402 = vand.u32 %v1401, 4294901760
        %1403 = vmatpush2.msra.mxu0 %v1402
        %v1404 = vand.u32 %v259, 4294901760
        %v1405 = vsub.f32 %v259, %v1404
        %v1406 = vand.u32 %v1405, 4294901760
        %1407 = vmatprep.subr.mxu0 %v1406
        %v1408 = vand.u32 %v258, 4294901760
        %v1409 = vsub.f32 %v258, %v1408
        %v1410 = vand.u32 %v1409, 4294901760
        %1411 = vmatpush2.msra.mxu0 %v1410
        %v1412 = vand.u32 %v257, 4294901760
        %v1413 = vsub.f32 %v257, %v1412
        %v1414 = vand.u32 %v1413, 4294901760
        %1415 = vmatprep.subr.mxu0 %v1414
        %v1416 = vand.u32 %v256, 4294901760
        %v1417 = vsub.f32 %v256, %v1416
        %v1418 = vand.u32 %v1417, 4294901760
        %1419 = vmatpush2.msra.mxu0 %v1418
        %v1420 = vand.u32 %v255, 4294901760
        %v1421 = vsub.f32 %v255, %v1420
        %v1422 = vand.u32 %v1421, 4294901760
        %1423 = vmatprep.subr.mxu0 %v1422
        %v1424 = vand.u32 %v254, 4294901760
        %v1425 = vsub.f32 %v254, %v1424
        %v1426 = vand.u32 %v1425, 4294901760
        %1427 = vmatpush2.msra.mxu0 %v1426
        %v1428 = vand.u32 %v253, 4294901760
        %v1429 = vsub.f32 %v253, %v1428
        %v1430 = vand.u32 %v1429, 4294901760
        %1431 = vmatprep.subr.mxu0 %v1430
        %v1432 = vand.u32 %v252, 4294901760
        %v1433 = vsub.f32 %v252, %v1432
        %v1434 = vand.u32 %v1433, 4294901760
        %1435 = vmatpush2.msra.mxu0 %v1434
        %v1436 = vand.u32 %v251, 4294901760
        %v1437 = vsub.f32 %v251, %v1436
        %v1438 = vand.u32 %v1437, 4294901760
        %1439 = vmatprep.subr.mxu0 %v1438
        %v1440 = vand.u32 %v250, 4294901760
        %v1441 = vsub.f32 %v250, %v1440
        %v1442 = vand.u32 %v1441, 4294901760
        %1443 = vmatpush2.msra.mxu0 %v1442
        %v1444 = vand.u32 %v249, 4294901760
        %v1445 = vsub.f32 %v249, %v1444
        %v1446 = vand.u32 %v1445, 4294901760
        %1447 = vmatprep.subr.mxu0 %v1446
        %v1448 = vand.u32 %v248, 4294901760
        %v1449 = vsub.f32 %v248, %v1448
        %v1450 = vand.u32 %v1449, 4294901760
        %1451 = vmatpush2.msra.mxu0 %v1450
        %v1452 = vand.u32 %v247, 4294901760
        %v1453 = vsub.f32 %v247, %v1452
        %v1454 = vand.u32 %v1453, 4294901760
        %1455 = vmatprep.subr.mxu0 %v1454
        %v1456 = vand.u32 %v246, 4294901760
        %v1457 = vsub.f32 %v246, %v1456
        %v1458 = vand.u32 %v1457, 4294901760
        %1459 = vmatpush2.msra.mxu0 %v1458
        %v1460 = vand.u32 %v245, 4294901760
        %v1461 = vsub.f32 %v245, %v1460
        %v1462 = vand.u32 %v1461, 4294901760
        %1463 = vmatprep.subr.mxu0 %v1462
        %v1464 = vand.u32 %v244, 4294901760
        %v1465 = vsub.f32 %v244, %v1464
        %v1466 = vand.u32 %v1465, 4294901760
        %1467 = vmatpush2.msra.mxu0 %v1466
        %v1468 = vand.u32 %v243, 4294901760
        %v1469 = vsub.f32 %v243, %v1468
        %v1470 = vand.u32 %v1469, 4294901760
        %1471 = vmatprep.subr.mxu0 %v1470
        %v1472 = vand.u32 %v242, 4294901760
        %v1473 = vsub.f32 %v242, %v1472
        %v1474 = vand.u32 %v1473, 4294901760
        %1475 = vmatpush2.msra.mxu0 %v1474
        %v1476 = vand.u32 %v195, 4294901760
        %1477 = vmatprep.mubr.f32.mxu0 %v1476
        %v1478 = vand.u32 %v194, 4294901760
        %1479 = vmatmul.mubr.f32.gmra.mxu0 %v1478
        %v1480 = vpop.f32.mrf.mxu0
        %v1481 = vadd.f32 %v1216, %v1480
        %v1482 = vpop.f32.mrf.mxu0
        %v1483 = vadd.f32 %v1218, %v1482
        %1484 = vdwg.mxu0
        %v1485 = vand.u32 %v241, 4294901760
        %1486 = vmatprep.subr.mxu0 %v1485
        %v1487 = vand.u32 %v240, 4294901760
        %1488 = vmatpush1.msra.mxu0 %v1487
        %v1489 = vand.u32 %v239, 4294901760
        %1490 = vmatprep.subr.mxu0 %v1489
        %v1491 = vand.u32 %v238, 4294901760
        %1492 = vmatpush1.msra.mxu0 %v1491
        %v1493 = vand.u32 %v237, 4294901760
        %1494 = vmatprep.subr.mxu0 %v1493
        %v1495 = vand.u32 %v236, 4294901760
        %1496 = vmatpush1.msra.mxu0 %v1495
        %v1497 = vand.u32 %v235, 4294901760
        %1498 = vmatprep.subr.mxu0 %v1497
        %v1499 = vand.u32 %v234, 4294901760
        %1500 = vmatpush1.msra.mxu0 %v1499
        %v1501 = vand.u32 %v233, 4294901760
        %1502 = vmatprep.subr.mxu0 %v1501
        %v1503 = vand.u32 %v232, 4294901760
        %1504 = vmatpush1.msra.mxu0 %v1503
        %v1505 = vand.u32 %v231, 4294901760
        %1506 = vmatprep.subr.mxu0 %v1505
        %v1507 = vand.u32 %v230, 4294901760
        %1508 = vmatpush1.msra.mxu0 %v1507
        %v1509 = vand.u32 %v229, 4294901760
        %1510 = vmatprep.subr.mxu0 %v1509
        %v1511 = vand.u32 %v228, 4294901760
        %1512 = vmatpush1.msra.mxu0 %v1511
        %v1513 = vand.u32 %v227, 4294901760
        %1514 = vmatprep.subr.mxu0 %v1513
        %v1515 = vand.u32 %v226, 4294901760
        %1516 = vmatpush1.msra.mxu0 %v1515
        %v1517 = vand.u32 %v225, 4294901760
        %1518 = vmatprep.subr.mxu0 %v1517
        %v1519 = vand.u32 %v224, 4294901760
        %1520 = vmatpush1.msra.mxu0 %v1519
        %v1521 = vand.u32 %v223, 4294901760
        %1522 = vmatprep.subr.mxu0 %v1521
        %v1523 = vand.u32 %v222, 4294901760
        %1524 = vmatpush1.msra.mxu0 %v1523
        %v1525 = vand.u32 %v221, 4294901760
        %1526 = vmatprep.subr.mxu0 %v1525
        %v1527 = vand.u32 %v220, 4294901760
        %1528 = vmatpush1.msra.mxu0 %v1527
        %v1529 = vand.u32 %v219, 4294901760
        %1530 = vmatprep.subr.mxu0 %v1529
        %v1531 = vand.u32 %v218, 4294901760
        %1532 = vmatpush1.msra.mxu0 %v1531
        %v1533 = vand.u32 %v217, 4294901760
        %1534 = vmatprep.subr.mxu0 %v1533
        %v1535 = vand.u32 %v216, 4294901760
        %1536 = vmatpush1.msra.mxu0 %v1535
        %v1537 = vand.u32 %v215, 4294901760
        %1538 = vmatprep.subr.mxu0 %v1537
        %v1539 = vand.u32 %v214, 4294901760
        %1540 = vmatpush1.msra.mxu0 %v1539
        %v1541 = vand.u32 %v213, 4294901760
        %1542 = vmatprep.subr.mxu0 %v1541
        %v1543 = vand.u32 %v212, 4294901760
        %1544 = vmatpush1.msra.mxu0 %v1543
        %v1545 = vand.u32 %v211, 4294901760
        %1546 = vmatprep.subr.mxu0 %v1545
        %v1547 = vand.u32 %v210, 4294901760
        %1548 = vmatpush1.msra.mxu0 %v1547
        %v1549 = vand.u32 %v273, 4294901760
        %1550 = vmatprep.subr.mxu0 %v1549
        %v1551 = vand.u32 %v272, 4294901760
        %1552 = vmatpush2.msra.mxu0 %v1551
        %v1553 = vand.u32 %v271, 4294901760
        %1554 = vmatprep.subr.mxu0 %v1553
        %v1555 = vand.u32 %v270, 4294901760
        %1556 = vmatpush2.msra.mxu0 %v1555
        %v1557 = vand.u32 %v269, 4294901760
        %1558 = vmatprep.subr.mxu0 %v1557
        %v1559 = vand.u32 %v268, 4294901760
        %1560 = vmatpush2.msra.mxu0 %v1559
        %v1561 = vand.u32 %v267, 4294901760
        %1562 = vmatprep.subr.mxu0 %v1561
        %v1563 = vand.u32 %v266, 4294901760
        %1564 = vmatpush2.msra.mxu0 %v1563
        %v1565 = vand.u32 %v265, 4294901760
        %1566 = vmatprep.subr.mxu0 %v1565
        %v1567 = vand.u32 %v264, 4294901760
        %1568 = vmatpush2.msra.mxu0 %v1567
        %v1569 = vand.u32 %v263, 4294901760
        %1570 = vmatprep.subr.mxu0 %v1569
        %v1571 = vand.u32 %v262, 4294901760
        %1572 = vmatpush2.msra.mxu0 %v1571
        %v1573 = vand.u32 %v261, 4294901760
        %1574 = vmatprep.subr.mxu0 %v1573
        %v1575 = vand.u32 %v260, 4294901760
        %1576 = vmatpush2.msra.mxu0 %v1575
        %v1577 = vand.u32 %v259, 4294901760
        %1578 = vmatprep.subr.mxu0 %v1577
        %v1579 = vand.u32 %v258, 4294901760
        %1580 = vmatpush2.msra.mxu0 %v1579
        %v1581 = vand.u32 %v257, 4294901760
        %1582 = vmatprep.subr.mxu0 %v1581
        %v1583 = vand.u32 %v256, 4294901760
        %1584 = vmatpush2.msra.mxu0 %v1583
        %v1585 = vand.u32 %v255, 4294901760
        %1586 = vmatprep.subr.mxu0 %v1585
        %v1587 = vand.u32 %v254, 4294901760
        %1588 = vmatpush2.msra.mxu0 %v1587
        %v1589 = vand.u32 %v253, 4294901760
        %1590 = vmatprep.subr.mxu0 %v1589
        %v1591 = vand.u32 %v252, 4294901760
        %1592 = vmatpush2.msra.mxu0 %v1591
        %v1593 = vand.u32 %v251, 4294901760
        %1594 = vmatprep.subr.mxu0 %v1593
        %v1595 = vand.u32 %v250, 4294901760
        %1596 = vmatpush2.msra.mxu0 %v1595
        %v1597 = vand.u32 %v249, 4294901760
        %1598 = vmatprep.subr.mxu0 %v1597
        %v1599 = vand.u32 %v248, 4294901760
        %1600 = vmatpush2.msra.mxu0 %v1599
        %v1601 = vand.u32 %v247, 4294901760
        %1602 = vmatprep.subr.mxu0 %v1601
        %v1603 = vand.u32 %v246, 4294901760
        %1604 = vmatpush2.msra.mxu0 %v1603
        %v1605 = vand.u32 %v245, 4294901760
        %1606 = vmatprep.subr.mxu0 %v1605
        %v1607 = vand.u32 %v244, 4294901760
        %1608 = vmatpush2.msra.mxu0 %v1607
        %v1609 = vand.u32 %v243, 4294901760
        %1610 = vmatprep.subr.mxu0 %v1609
        %v1611 = vand.u32 %v242, 4294901760
        %1612 = vmatpush2.msra.mxu0 %v1611
        %v1613 = vand.u32 %v195, 4294901760
        %1614 = vmatprep.mubr.f32.mxu0 %v1613
        %v1615 = vand.u32 %v194, 4294901760
        %1616 = vmatmul.mubr.f32.gmra.mxu0 %v1615
        %v1617 = vpop.f32.mrf.mxu0
        %v1618 = vadd.f32 %v1481, %v1617
        %v1619 = vpop.f32.mrf.mxu0
        %v1620 = vadd.f32 %v1483, %v1619
        %1621 = vdwg.mxu0
        %v1622 = vand.u32 %v305, 4294901760
        %1623 = vmatprep.subr.mxu0 %v1622
        %v1624 = vand.u32 %v304, 4294901760
        %1625 = vmatpush1.msra.mxu0 %v1624
        %v1626 = vand.u32 %v303, 4294901760
        %1627 = vmatprep.subr.mxu0 %v1626
        %v1628 = vand.u32 %v302, 4294901760
        %1629 = vmatpush1.msra.mxu0 %v1628
        %v1630 = vand.u32 %v301, 4294901760
        %1631 = vmatprep.subr.mxu0 %v1630
        %v1632 = vand.u32 %v300, 4294901760
        %1633 = vmatpush1.msra.mxu0 %v1632
        %v1634 = vand.u32 %v299, 4294901760
        %1635 = vmatprep.subr.mxu0 %v1634
        %v1636 = vand.u32 %v298, 4294901760
        %1637 = vmatpush1.msra.mxu0 %v1636
        %v1638 = vand.u32 %v297, 4294901760
        %1639 = vmatprep.subr.mxu0 %v1638
        %v1640 = vand.u32 %v296, 4294901760
        %1641 = vmatpush1.msra.mxu0 %v1640
        %v1642 = vand.u32 %v295, 4294901760
        %1643 = vmatprep.subr.mxu0 %v1642
        %v1644 = vand.u32 %v294, 4294901760
        %1645 = vmatpush1.msra.mxu0 %v1644
        %v1646 = vand.u32 %v293, 4294901760
        %1647 = vmatprep.subr.mxu0 %v1646
        %v1648 = vand.u32 %v292, 4294901760
        %1649 = vmatpush1.msra.mxu0 %v1648
        %v1650 = vand.u32 %v291, 4294901760
        %1651 = vmatprep.subr.mxu0 %v1650
        %v1652 = vand.u32 %v290, 4294901760
        %1653 = vmatpush1.msra.mxu0 %v1652
        %v1654 = vand.u32 %v289, 4294901760
        %1655 = vmatprep.subr.mxu0 %v1654
        %v1656 = vand.u32 %v288, 4294901760
        %1657 = vmatpush1.msra.mxu0 %v1656
        %v1658 = vand.u32 %v287, 4294901760
        %1659 = vmatprep.subr.mxu0 %v1658
        %v1660 = vand.u32 %v286, 4294901760
        %1661 = vmatpush1.msra.mxu0 %v1660
        %v1662 = vand.u32 %v285, 4294901760
        %1663 = vmatprep.subr.mxu0 %v1662
        %v1664 = vand.u32 %v284, 4294901760
        %1665 = vmatpush1.msra.mxu0 %v1664
        %v1666 = vand.u32 %v283, 4294901760
        %1667 = vmatprep.subr.mxu0 %v1666
        %v1668 = vand.u32 %v282, 4294901760
        %1669 = vmatpush1.msra.mxu0 %v1668
        %v1670 = vand.u32 %v281, 4294901760
        %1671 = vmatprep.subr.mxu0 %v1670
        %v1672 = vand.u32 %v280, 4294901760
        %1673 = vmatpush1.msra.mxu0 %v1672
        %v1674 = vand.u32 %v279, 4294901760
        %1675 = vmatprep.subr.mxu0 %v1674
        %v1676 = vand.u32 %v278, 4294901760
        %1677 = vmatpush1.msra.mxu0 %v1676
        %v1678 = vand.u32 %v277, 4294901760
        %1679 = vmatprep.subr.mxu0 %v1678
        %v1680 = vand.u32 %v276, 4294901760
        %1681 = vmatpush1.msra.mxu0 %v1680
        %v1682 = vand.u32 %v275, 4294901760
        %1683 = vmatprep.subr.mxu0 %v1682
        %v1684 = vand.u32 %v274, 4294901760
        %1685 = vmatpush1.msra.mxu0 %v1684
        %v1686 = vand.u32 %v337, 4294901760
        %1687 = vmatprep.subr.mxu0 %v1686
        %v1688 = vand.u32 %v336, 4294901760
        %1689 = vmatpush2.msra.mxu0 %v1688
        %v1690 = vand.u32 %v335, 4294901760
        %1691 = vmatprep.subr.mxu0 %v1690
        %v1692 = vand.u32 %v334, 4294901760
        %1693 = vmatpush2.msra.mxu0 %v1692
        %v1694 = vand.u32 %v333, 4294901760
        %1695 = vmatprep.subr.mxu0 %v1694
        %v1696 = vand.u32 %v332, 4294901760
        %1697 = vmatpush2.msra.mxu0 %v1696
        %v1698 = vand.u32 %v331, 4294901760
        %1699 = vmatprep.subr.mxu0 %v1698
        %v1700 = vand.u32 %v330, 4294901760
        %1701 = vmatpush2.msra.mxu0 %v1700
        %v1702 = vand.u32 %v329, 4294901760
        %1703 = vmatprep.subr.mxu0 %v1702
        %v1704 = vand.u32 %v328, 4294901760
        %1705 = vmatpush2.msra.mxu0 %v1704
        %v1706 = vand.u32 %v327, 4294901760
        %1707 = vmatprep.subr.mxu0 %v1706
        %v1708 = vand.u32 %v326, 4294901760
        %1709 = vmatpush2.msra.mxu0 %v1708
        %v1710 = vand.u32 %v325, 4294901760
        %1711 = vmatprep.subr.mxu0 %v1710
        %v1712 = vand.u32 %v324, 4294901760
        %1713 = vmatpush2.msra.mxu0 %v1712
        %v1714 = vand.u32 %v323, 4294901760
        %1715 = vmatprep.subr.mxu0 %v1714
        %v1716 = vand.u32 %v322, 4294901760
        %1717 = vmatpush2.msra.mxu0 %v1716
        %v1718 = vand.u32 %v321, 4294901760
        %1719 = vmatprep.subr.mxu0 %v1718
        %v1720 = vand.u32 %v320, 4294901760
        %1721 = vmatpush2.msra.mxu0 %v1720
        %v1722 = vand.u32 %v319, 4294901760
        %1723 = vmatprep.subr.mxu0 %v1722
        %v1724 = vand.u32 %v318, 4294901760
        %1725 = vmatpush2.msra.mxu0 %v1724
        %v1726 = vand.u32 %v317, 4294901760
        %1727 = vmatprep.subr.mxu0 %v1726
        %v1728 = vand.u32 %v316, 4294901760
        %1729 = vmatpush2.msra.mxu0 %v1728
        %v1730 = vand.u32 %v315, 4294901760
        %1731 = vmatprep.subr.mxu0 %v1730
        %v1732 = vand.u32 %v314, 4294901760
        %1733 = vmatpush2.msra.mxu0 %v1732
        %v1734 = vand.u32 %v313, 4294901760
        %1735 = vmatprep.subr.mxu0 %v1734
        %v1736 = vand.u32 %v312, 4294901760
        %1737 = vmatpush2.msra.mxu0 %v1736
        %v1738 = vand.u32 %v311, 4294901760
        %1739 = vmatprep.subr.mxu0 %v1738
        %v1740 = vand.u32 %v310, 4294901760
        %1741 = vmatpush2.msra.mxu0 %v1740
        %v1742 = vand.u32 %v309, 4294901760
        %1743 = vmatprep.subr.mxu0 %v1742
        %v1744 = vand.u32 %v308, 4294901760
        %1745 = vmatpush2.msra.mxu0 %v1744
        %v1746 = vand.u32 %v307, 4294901760
        %1747 = vmatprep.subr.mxu0 %v1746
        %v1748 = vand.u32 %v306, 4294901760
        %1749 = vmatpush2.msra.mxu0 %v1748
        %v1750 = vand.u32 %v209, 4294901760
        %v1751 = vsub.f32 %v209, %v1750
        %v1752 = vand.u32 %v1751, 4294901760
        %v1753 = vsub.f32 %v1751, %v1752
        %v1754 = vand.u32 %v1753, 4294901760
        %1755 = vmatprep.mubr.f32.mxu0 %v1754
        %v1756 = vand.u32 %v202, 4294901760
        %v1757 = vsub.f32 %v202, %v1756
        %v1758 = vand.u32 %v1757, 4294901760
        %v1759 = vsub.f32 %v1757, %v1758
        %v1760 = vand.u32 %v1759, 4294901760
        %1761 = vmatmul.mubr.f32.gmra.mxu0 %v1760
        %v1762 = vpop.f32.mrf.mxu0
        %v1763 = vadd.f32 %v1618, %v1762
        %v1764 = vpop.f32.mrf.mxu0
        %v1765 = vadd.f32 %v1620, %v1764
        %1766 = vdwg.mxu0
        %v1767 = vand.u32 %v305, 4294901760
        %v1768 = vsub.f32 %v305, %v1767
        %v1769 = vand.u32 %v1768, 4294901760
        %v1770 = vsub.f32 %v1768, %v1769
        %v1771 = vand.u32 %v1770, 4294901760
        %1772 = vmatprep.subr.mxu0 %v1771
        %v1773 = vand.u32 %v304, 4294901760
        %v1774 = vsub.f32 %v304, %v1773
        %v1775 = vand.u32 %v1774, 4294901760
        %v1776 = vsub.f32 %v1774, %v1775
        %v1777 = vand.u32 %v1776, 4294901760
        %1778 = vmatpush1.msra.mxu0 %v1777
        %v1779 = vand.u32 %v303, 4294901760
        %v1780 = vsub.f32 %v303, %v1779
        %v1781 = vand.u32 %v1780, 4294901760
        %v1782 = vsub.f32 %v1780, %v1781
        %v1783 = vand.u32 %v1782, 4294901760
        %1784 = vmatprep.subr.mxu0 %v1783
        %v1785 = vand.u32 %v302, 4294901760
        %v1786 = vsub.f32 %v302, %v1785
        %v1787 = vand.u32 %v1786, 4294901760
        %v1788 = vsub.f32 %v1786, %v1787
        %v1789 = vand.u32 %v1788, 4294901760
        %1790 = vmatpush1.msra.mxu0 %v1789
        %v1791 = vand.u32 %v301, 4294901760
        %v1792 = vsub.f32 %v301, %v1791
        %v1793 = vand.u32 %v1792, 4294901760
        %v1794 = vsub.f32 %v1792, %v1793
        %v1795 = vand.u32 %v1794, 4294901760
        %1796 = vmatprep.subr.mxu0 %v1795
        %v1797 = vand.u32 %v300, 4294901760
        %v1798 = vsub.f32 %v300, %v1797
        %v1799 = vand.u32 %v1798, 4294901760
        %v1800 = vsub.f32 %v1798, %v1799
        %v1801 = vand.u32 %v1800, 4294901760
        %1802 = vmatpush1.msra.mxu0 %v1801
        %v1803 = vand.u32 %v299, 4294901760
        %v1804 = vsub.f32 %v299, %v1803
        %v1805 = vand.u32 %v1804, 4294901760
        %v1806 = vsub.f32 %v1804, %v1805
        %v1807 = vand.u32 %v1806, 4294901760
        %1808 = vmatprep.subr.mxu0 %v1807
        %v1809 = vand.u32 %v298, 4294901760
        %v1810 = vsub.f32 %v298, %v1809
        %v1811 = vand.u32 %v1810, 4294901760
        %v1812 = vsub.f32 %v1810, %v1811
        %v1813 = vand.u32 %v1812, 4294901760
        %1814 = vmatpush1.msra.mxu0 %v1813
        %v1815 = vand.u32 %v297, 4294901760
        %v1816 = vsub.f32 %v297, %v1815
        %v1817 = vand.u32 %v1816, 4294901760
        %v1818 = vsub.f32 %v1816, %v1817
        %v1819 = vand.u32 %v1818, 4294901760
        %1820 = vmatprep.subr.mxu0 %v1819
        %v1821 = vand.u32 %v296, 4294901760
        %v1822 = vsub.f32 %v296, %v1821
        %v1823 = vand.u32 %v1822, 4294901760
        %v1824 = vsub.f32 %v1822, %v1823
        %v1825 = vand.u32 %v1824, 4294901760
        %1826 = vmatpush1.msra.mxu0 %v1825
        %v1827 = vand.u32 %v295, 4294901760
        %v1828 = vsub.f32 %v295, %v1827
        %v1829 = vand.u32 %v1828, 4294901760
        %v1830 = vsub.f32 %v1828, %v1829
        %v1831 = vand.u32 %v1830, 4294901760
        %1832 = vmatprep.subr.mxu0 %v1831
        %v1833 = vand.u32 %v294, 4294901760
        %v1834 = vsub.f32 %v294, %v1833
        %v1835 = vand.u32 %v1834, 4294901760
        %v1836 = vsub.f32 %v1834, %v1835
        %v1837 = vand.u32 %v1836, 4294901760
        %1838 = vmatpush1.msra.mxu0 %v1837
        %v1839 = vand.u32 %v293, 4294901760
        %v1840 = vsub.f32 %v293, %v1839
        %v1841 = vand.u32 %v1840, 4294901760
        %v1842 = vsub.f32 %v1840, %v1841
        %v1843 = vand.u32 %v1842, 4294901760
        %1844 = vmatprep.subr.mxu0 %v1843
        %v1845 = vand.u32 %v292, 4294901760
        %v1846 = vsub.f32 %v292, %v1845
        %v1847 = vand.u32 %v1846, 4294901760
        %v1848 = vsub.f32 %v1846, %v1847
        %v1849 = vand.u32 %v1848, 4294901760
        %1850 = vmatpush1.msra.mxu0 %v1849
        %v1851 = vand.u32 %v291, 4294901760
        %v1852 = vsub.f32 %v291, %v1851
        %v1853 = vand.u32 %v1852, 4294901760
        %v1854 = vsub.f32 %v1852, %v1853
        %v1855 = vand.u32 %v1854, 4294901760
        %1856 = vmatprep.subr.mxu0 %v1855
        %v1857 = vand.u32 %v290, 4294901760
        %v1858 = vsub.f32 %v290, %v1857
        %v1859 = vand.u32 %v1858, 4294901760
        %v1860 = vsub.f32 %v1858, %v1859
        %v1861 = vand.u32 %v1860, 4294901760
        %1862 = vmatpush1.msra.mxu0 %v1861
        %v1863 = vand.u32 %v289, 4294901760
        %v1864 = vsub.f32 %v289, %v1863
        %v1865 = vand.u32 %v1864, 4294901760
        %v1866 = vsub.f32 %v1864, %v1865
        %v1867 = vand.u32 %v1866, 4294901760
        %1868 = vmatprep.subr.mxu0 %v1867
        %v1869 = vand.u32 %v288, 4294901760
        %v1870 = vsub.f32 %v288, %v1869
        %v1871 = vand.u32 %v1870, 4294901760
        %v1872 = vsub.f32 %v1870, %v1871
        %v1873 = vand.u32 %v1872, 4294901760
        %1874 = vmatpush1.msra.mxu0 %v1873
        %v1875 = vand.u32 %v287, 4294901760
        %v1876 = vsub.f32 %v287, %v1875
        %v1877 = vand.u32 %v1876, 4294901760
        %v1878 = vsub.f32 %v1876, %v1877
        %v1879 = vand.u32 %v1878, 4294901760
        %1880 = vmatprep.subr.mxu0 %v1879
        %v1881 = vand.u32 %v286, 4294901760
        %v1882 = vsub.f32 %v286, %v1881
        %v1883 = vand.u32 %v1882, 4294901760
        %v1884 = vsub.f32 %v1882, %v1883
        %v1885 = vand.u32 %v1884, 4294901760
        %1886 = vmatpush1.msra.mxu0 %v1885
        %v1887 = vand.u32 %v285, 4294901760
        %v1888 = vsub.f32 %v285, %v1887
        %v1889 = vand.u32 %v1888, 4294901760
        %v1890 = vsub.f32 %v1888, %v1889
        %v1891 = vand.u32 %v1890, 4294901760
        %1892 = vmatprep.subr.mxu0 %v1891
        %v1893 = vand.u32 %v284, 4294901760
        %v1894 = vsub.f32 %v284, %v1893
        %v1895 = vand.u32 %v1894, 4294901760
        %v1896 = vsub.f32 %v1894, %v1895
        %v1897 = vand.u32 %v1896, 4294901760
        %1898 = vmatpush1.msra.mxu0 %v1897
        %v1899 = vand.u32 %v283, 4294901760
        %v1900 = vsub.f32 %v283, %v1899
        %v1901 = vand.u32 %v1900, 4294901760
        %v1902 = vsub.f32 %v1900, %v1901
        %v1903 = vand.u32 %v1902, 4294901760
        %1904 = vmatprep.subr.mxu0 %v1903
        %v1905 = vand.u32 %v282, 4294901760
        %v1906 = vsub.f32 %v282, %v1905
        %v1907 = vand.u32 %v1906, 4294901760
        %v1908 = vsub.f32 %v1906, %v1907
        %v1909 = vand.u32 %v1908, 4294901760
        %1910 = vmatpush1.msra.mxu0 %v1909
        %v1911 = vand.u32 %v281, 4294901760
        %v1912 = vsub.f32 %v281, %v1911
        %v1913 = vand.u32 %v1912, 4294901760
        %v1914 = vsub.f32 %v1912, %v1913
        %v1915 = vand.u32 %v1914, 4294901760
        %1916 = vmatprep.subr.mxu0 %v1915
        %v1917 = vand.u32 %v280, 4294901760
        %v1918 = vsub.f32 %v280, %v1917
        %v1919 = vand.u32 %v1918, 4294901760
        %v1920 = vsub.f32 %v1918, %v1919
        %v1921 = vand.u32 %v1920, 4294901760
        %1922 = vmatpush1.msra.mxu0 %v1921
        %v1923 = vand.u32 %v279, 4294901760
        %v1924 = vsub.f32 %v279, %v1923
        %v1925 = vand.u32 %v1924, 4294901760
        %v1926 = vsub.f32 %v1924, %v1925
        %v1927 = vand.u32 %v1926, 4294901760
        %1928 = vmatprep.subr.mxu0 %v1927
        %v1929 = vand.u32 %v278, 4294901760
        %v1930 = vsub.f32 %v278, %v1929
        %v1931 = vand.u32 %v1930, 4294901760
        %v1932 = vsub.f32 %v1930, %v1931
        %v1933 = vand.u32 %v1932, 4294901760
        %1934 = vmatpush1.msra.mxu0 %v1933
        %v1935 = vand.u32 %v277, 4294901760
        %v1936 = vsub.f32 %v277, %v1935
        %v1937 = vand.u32 %v1936, 4294901760
        %v1938 = vsub.f32 %v1936, %v1937
        %v1939 = vand.u32 %v1938, 4294901760
        %1940 = vmatprep.subr.mxu0 %v1939
        %v1941 = vand.u32 %v276, 4294901760
        %v1942 = vsub.f32 %v276, %v1941
        %v1943 = vand.u32 %v1942, 4294901760
        %v1944 = vsub.f32 %v1942, %v1943
        %v1945 = vand.u32 %v1944, 4294901760
        %1946 = vmatpush1.msra.mxu0 %v1945
        %v1947 = vand.u32 %v275, 4294901760
        %v1948 = vsub.f32 %v275, %v1947
        %v1949 = vand.u32 %v1948, 4294901760
        %v1950 = vsub.f32 %v1948, %v1949
        %v1951 = vand.u32 %v1950, 4294901760
        %1952 = vmatprep.subr.mxu0 %v1951
        %v1953 = vand.u32 %v274, 4294901760
        %v1954 = vsub.f32 %v274, %v1953
        %v1955 = vand.u32 %v1954, 4294901760
        %v1956 = vsub.f32 %v1954, %v1955
        %v1957 = vand.u32 %v1956, 4294901760
        %1958 = vmatpush1.msra.mxu0 %v1957
        %v1959 = vand.u32 %v337, 4294901760
        %v1960 = vsub.f32 %v337, %v1959
        %v1961 = vand.u32 %v1960, 4294901760
        %v1962 = vsub.f32 %v1960, %v1961
        %v1963 = vand.u32 %v1962, 4294901760
        %1964 = vmatprep.subr.mxu0 %v1963
        %v1965 = vand.u32 %v336, 4294901760
        %v1966 = vsub.f32 %v336, %v1965
        %v1967 = vand.u32 %v1966, 4294901760
        %v1968 = vsub.f32 %v1966, %v1967
        %v1969 = vand.u32 %v1968, 4294901760
        %1970 = vmatpush2.msra.mxu0 %v1969
        %v1971 = vand.u32 %v335, 4294901760
        %v1972 = vsub.f32 %v335, %v1971
        %v1973 = vand.u32 %v1972, 4294901760
        %v1974 = vsub.f32 %v1972, %v1973
        %v1975 = vand.u32 %v1974, 4294901760
        %1976 = vmatprep.subr.mxu0 %v1975
        %v1977 = vand.u32 %v334, 4294901760
        %v1978 = vsub.f32 %v334, %v1977
        %v1979 = vand.u32 %v1978, 4294901760
        %v1980 = vsub.f32 %v1978, %v1979
        %v1981 = vand.u32 %v1980, 4294901760
        %1982 = vmatpush2.msra.mxu0 %v1981
        %v1983 = vand.u32 %v333, 4294901760
        %v1984 = vsub.f32 %v333, %v1983
        %v1985 = vand.u32 %v1984, 4294901760
        %v1986 = vsub.f32 %v1984, %v1985
        %v1987 = vand.u32 %v1986, 4294901760
        %1988 = vmatprep.subr.mxu0 %v1987
        %v1989 = vand.u32 %v332, 4294901760
        %v1990 = vsub.f32 %v332, %v1989
        %v1991 = vand.u32 %v1990, 4294901760
        %v1992 = vsub.f32 %v1990, %v1991
        %v1993 = vand.u32 %v1992, 4294901760
        %1994 = vmatpush2.msra.mxu0 %v1993
        %v1995 = vand.u32 %v331, 4294901760
        %v1996 = vsub.f32 %v331, %v1995
        %v1997 = vand.u32 %v1996, 4294901760
        %v1998 = vsub.f32 %v1996, %v1997
        %v1999 = vand.u32 %v1998, 4294901760
        %2000 = vmatprep.subr.mxu0 %v1999
        %v2001 = vand.u32 %v330, 4294901760
        %v2002 = vsub.f32 %v330, %v2001
        %v2003 = vand.u32 %v2002, 4294901760
        %v2004 = vsub.f32 %v2002, %v2003
        %v2005 = vand.u32 %v2004, 4294901760
        %2006 = vmatpush2.msra.mxu0 %v2005
        %v2007 = vand.u32 %v329, 4294901760
        %v2008 = vsub.f32 %v329, %v2007
        %v2009 = vand.u32 %v2008, 4294901760
        %v2010 = vsub.f32 %v2008, %v2009
        %v2011 = vand.u32 %v2010, 4294901760
        %2012 = vmatprep.subr.mxu0 %v2011
        %v2013 = vand.u32 %v328, 4294901760
        %v2014 = vsub.f32 %v328, %v2013
        %v2015 = vand.u32 %v2014, 4294901760
        %v2016 = vsub.f32 %v2014, %v2015
        %v2017 = vand.u32 %v2016, 4294901760
        %2018 = vmatpush2.msra.mxu0 %v2017
        %v2019 = vand.u32 %v327, 4294901760
        %v2020 = vsub.f32 %v327, %v2019
        %v2021 = vand.u32 %v2020, 4294901760
        %v2022 = vsub.f32 %v2020, %v2021
        %v2023 = vand.u32 %v2022, 4294901760
        %2024 = vmatprep.subr.mxu0 %v2023
        %v2025 = vand.u32 %v326, 4294901760
        %v2026 = vsub.f32 %v326, %v2025
        %v2027 = vand.u32 %v2026, 4294901760
        %v2028 = vsub.f32 %v2026, %v2027
        %v2029 = vand.u32 %v2028, 4294901760
        %2030 = vmatpush2.msra.mxu0 %v2029
        %v2031 = vand.u32 %v325, 4294901760
        %v2032 = vsub.f32 %v325, %v2031
        %v2033 = vand.u32 %v2032, 4294901760
        %v2034 = vsub.f32 %v2032, %v2033
        %v2035 = vand.u32 %v2034, 4294901760
        %2036 = vmatprep.subr.mxu0 %v2035
        %v2037 = vand.u32 %v324, 4294901760
        %v2038 = vsub.f32 %v324, %v2037
        %v2039 = vand.u32 %v2038, 4294901760
        %v2040 = vsub.f32 %v2038, %v2039
        %v2041 = vand.u32 %v2040, 4294901760
        %2042 = vmatpush2.msra.mxu0 %v2041
        %v2043 = vand.u32 %v323, 4294901760
        %v2044 = vsub.f32 %v323, %v2043
        %v2045 = vand.u32 %v2044, 4294901760
        %v2046 = vsub.f32 %v2044, %v2045
        %v2047 = vand.u32 %v2046, 4294901760
        %2048 = vmatprep.subr.mxu0 %v2047
        %v2049 = vand.u32 %v322, 4294901760
        %v2050 = vsub.f32 %v322, %v2049
        %v2051 = vand.u32 %v2050, 4294901760
        %v2052 = vsub.f32 %v2050, %v2051
        %v2053 = vand.u32 %v2052, 4294901760
        %2054 = vmatpush2.msra.mxu0 %v2053
        %v2055 = vand.u32 %v321, 4294901760
        %v2056 = vsub.f32 %v321, %v2055
        %v2057 = vand.u32 %v2056, 4294901760
        %v2058 = vsub.f32 %v2056, %v2057
        %v2059 = vand.u32 %v2058, 4294901760
        %2060 = vmatprep.subr.mxu0 %v2059
        %v2061 = vand.u32 %v320, 4294901760
        %v2062 = vsub.f32 %v320, %v2061
        %v2063 = vand.u32 %v2062, 4294901760
        %v2064 = vsub.f32 %v2062, %v2063
        %v2065 = vand.u32 %v2064, 4294901760
        %2066 = vmatpush2.msra.mxu0 %v2065
        %v2067 = vand.u32 %v319, 4294901760
        %v2068 = vsub.f32 %v319, %v2067
        %v2069 = vand.u32 %v2068, 4294901760
        %v2070 = vsub.f32 %v2068, %v2069
        %v2071 = vand.u32 %v2070, 4294901760
        %2072 = vmatprep.subr.mxu0 %v2071
        %v2073 = vand.u32 %v318, 4294901760
        %v2074 = vsub.f32 %v318, %v2073
        %v2075 = vand.u32 %v2074, 4294901760
        %v2076 = vsub.f32 %v2074, %v2075
        %v2077 = vand.u32 %v2076, 4294901760
        %2078 = vmatpush2.msra.mxu0 %v2077
        %v2079 = vand.u32 %v317, 4294901760
        %v2080 = vsub.f32 %v317, %v2079
        %v2081 = vand.u32 %v2080, 4294901760
        %v2082 = vsub.f32 %v2080, %v2081
        %v2083 = vand.u32 %v2082, 4294901760
        %2084 = vmatprep.subr.mxu0 %v2083
        %v2085 = vand.u32 %v316, 4294901760
        %v2086 = vsub.f32 %v316, %v2085
        %v2087 = vand.u32 %v2086, 4294901760
        %v2088 = vsub.f32 %v2086, %v2087
        %v2089 = vand.u32 %v2088, 4294901760
        %2090 = vmatpush2.msra.mxu0 %v2089
        %v2091 = vand.u32 %v315, 4294901760
        %v2092 = vsub.f32 %v315, %v2091
        %v2093 = vand.u32 %v2092, 4294901760
        %v2094 = vsub.f32 %v2092, %v2093
        %v2095 = vand.u32 %v2094, 4294901760
        %2096 = vmatprep.subr.mxu0 %v2095
        %v2097 = vand.u32 %v314, 4294901760
        %v2098 = vsub.f32 %v314, %v2097
        %v2099 = vand.u32 %v2098, 4294901760
        %v2100 = vsub.f32 %v2098, %v2099
        %v2101 = vand.u32 %v2100, 4294901760
        %2102 = vmatpush2.msra.mxu0 %v2101
        %v2103 = vand.u32 %v313, 4294901760
        %v2104 = vsub.f32 %v313, %v2103
        %v2105 = vand.u32 %v2104, 4294901760
        %v2106 = vsub.f32 %v2104, %v2105
        %v2107 = vand.u32 %v2106, 4294901760
        %2108 = vmatprep.subr.mxu0 %v2107
        %v2109 = vand.u32 %v312, 4294901760
        %v2110 = vsub.f32 %v312, %v2109
        %v2111 = vand.u32 %v2110, 4294901760
        %v2112 = vsub.f32 %v2110, %v2111
        %v2113 = vand.u32 %v2112, 4294901760
        %2114 = vmatpush2.msra.mxu0 %v2113
        %v2115 = vand.u32 %v311, 4294901760
        %v2116 = vsub.f32 %v311, %v2115
        %v2117 = vand.u32 %v2116, 4294901760
        %v2118 = vsub.f32 %v2116, %v2117
        %v2119 = vand.u32 %v2118, 4294901760
        %2120 = vmatprep.subr.mxu0 %v2119
        %v2121 = vand.u32 %v310, 4294901760
        %v2122 = vsub.f32 %v310, %v2121
        %v2123 = vand.u32 %v2122, 4294901760
        %v2124 = vsub.f32 %v2122, %v2123
        %v2125 = vand.u32 %v2124, 4294901760
        %2126 = vmatpush2.msra.mxu0 %v2125
        %v2127 = vand.u32 %v309, 4294901760
        %v2128 = vsub.f32 %v309, %v2127
        %v2129 = vand.u32 %v2128, 4294901760
        %v2130 = vsub.f32 %v2128, %v2129
        %v2131 = vand.u32 %v2130, 4294901760
        %2132 = vmatprep.subr.mxu0 %v2131
        %v2133 = vand.u32 %v308, 4294901760
        %v2134 = vsub.f32 %v308, %v2133
        %v2135 = vand.u32 %v2134, 4294901760
        %v2136 = vsub.f32 %v2134, %v2135
        %v2137 = vand.u32 %v2136, 4294901760
        %2138 = vmatpush2.msra.mxu0 %v2137
        %v2139 = vand.u32 %v307, 4294901760
        %v2140 = vsub.f32 %v307, %v2139
        %v2141 = vand.u32 %v2140, 4294901760
        %v2142 = vsub.f32 %v2140, %v2141
        %v2143 = vand.u32 %v2142, 4294901760
        %2144 = vmatprep.subr.mxu0 %v2143
        %v2145 = vand.u32 %v306, 4294901760
        %v2146 = vsub.f32 %v306, %v2145
        %v2147 = vand.u32 %v2146, 4294901760
        %v2148 = vsub.f32 %v2146, %v2147
        %v2149 = vand.u32 %v2148, 4294901760
        %2150 = vmatpush2.msra.mxu0 %v2149
        %v2151 = vand.u32 %v209, 4294901760
        %2152 = vmatprep.mubr.f32.mxu0 %v2151
        %v2153 = vand.u32 %v202, 4294901760
        %2154 = vmatmul.mubr.f32.gmra.mxu0 %v2153
        %v2155 = vpop.f32.mrf.mxu0
        %v2156 = vadd.f32 %v1763, %v2155
        %v2157 = vpop.f32.mrf.mxu0
        %v2158 = vadd.f32 %v1765, %v2157
        %2159 = vdwg.mxu0
        %v2160 = vand.u32 %v305, 4294901760
        %v2161 = vsub.f32 %v305, %v2160
        %2162 = vmatprep.subr.mxu0 %v2161
        %v2163 = vand.u32 %v304, 4294901760
        %v2164 = vsub.f32 %v304, %v2163
        %2165 = vmatpush1.msra.mxu0 %v2164
        %v2166 = vand.u32 %v303, 4294901760
        %v2167 = vsub.f32 %v303, %v2166
        %2168 = vmatprep.subr.mxu0 %v2167
        %v2169 = vand.u32 %v302, 4294901760
        %v2170 = vsub.f32 %v302, %v2169
        %2171 = vmatpush1.msra.mxu0 %v2170
        %v2172 = vand.u32 %v301, 4294901760
        %v2173 = vsub.f32 %v301, %v2172
        %2174 = vmatprep.subr.mxu0 %v2173
        %v2175 = vand.u32 %v300, 4294901760
        %v2176 = vsub.f32 %v300, %v2175
        %2177 = vmatpush1.msra.mxu0 %v2176
        %v2178 = vand.u32 %v299, 4294901760
        %v2179 = vsub.f32 %v299, %v2178
        %2180 = vmatprep.subr.mxu0 %v2179
        %v2181 = vand.u32 %v298, 4294901760
        %v2182 = vsub.f32 %v298, %v2181
        %2183 = vmatpush1.msra.mxu0 %v2182
        %v2184 = vand.u32 %v297, 4294901760
        %v2185 = vsub.f32 %v297, %v2184
        %2186 = vmatprep.subr.mxu0 %v2185
        %v2187 = vand.u32 %v296, 4294901760
        %v2188 = vsub.f32 %v296, %v2187
        %2189 = vmatpush1.msra.mxu0 %v2188
        %v2190 = vand.u32 %v295, 4294901760
        %v2191 = vsub.f32 %v295, %v2190
        %2192 = vmatprep.subr.mxu0 %v2191
        %v2193 = vand.u32 %v294, 4294901760
        %v2194 = vsub.f32 %v294, %v2193
        %2195 = vmatpush1.msra.mxu0 %v2194
        %v2196 = vand.u32 %v293, 4294901760
        %v2197 = vsub.f32 %v293, %v2196
        %2198 = vmatprep.subr.mxu0 %v2197
        %v2199 = vand.u32 %v292, 4294901760
        %v2200 = vsub.f32 %v292, %v2199
        %2201 = vmatpush1.msra.mxu0 %v2200
        %v2202 = vand.u32 %v291, 4294901760
        %v2203 = vsub.f32 %v291, %v2202
        %2204 = vmatprep.subr.mxu0 %v2203
        %v2205 = vand.u32 %v290, 4294901760
        %v2206 = vsub.f32 %v290, %v2205
        %2207 = vmatpush1.msra.mxu0 %v2206
        %v2208 = vand.u32 %v289, 4294901760
        %v2209 = vsub.f32 %v289, %v2208
        %2210 = vmatprep.subr.mxu0 %v2209
        %v2211 = vand.u32 %v288, 4294901760
        %v2212 = vsub.f32 %v288, %v2211
        %2213 = vmatpush1.msra.mxu0 %v2212
        %v2214 = vand.u32 %v287, 4294901760
        %v2215 = vsub.f32 %v287, %v2214
        %2216 = vmatprep.subr.mxu0 %v2215
        %v2217 = vand.u32 %v286, 4294901760
        %v2218 = vsub.f32 %v286, %v2217
        %2219 = vmatpush1.msra.mxu0 %v2218
        %v2220 = vand.u32 %v285, 4294901760
        %v2221 = vsub.f32 %v285, %v2220
        %2222 = vmatprep.subr.mxu0 %v2221
        %v2223 = vand.u32 %v284, 4294901760
        %v2224 = vsub.f32 %v284, %v2223
        %2225 = vmatpush1.msra.mxu0 %v2224
        %v2226 = vand.u32 %v283, 4294901760
        %v2227 = vsub.f32 %v283, %v2226
        %2228 = vmatprep.subr.mxu0 %v2227
        %v2229 = vand.u32 %v282, 4294901760
        %v2230 = vsub.f32 %v282, %v2229
        %2231 = vmatpush1.msra.mxu0 %v2230
        %v2232 = vand.u32 %v281, 4294901760
        %v2233 = vsub.f32 %v281, %v2232
        %2234 = vmatprep.subr.mxu0 %v2233
        %v2235 = vand.u32 %v280, 4294901760
        %v2236 = vsub.f32 %v280, %v2235
        %2237 = vmatpush1.msra.mxu0 %v2236
        %v2238 = vand.u32 %v279, 4294901760
        %v2239 = vsub.f32 %v279, %v2238
        %2240 = vmatprep.subr.mxu0 %v2239
        %v2241 = vand.u32 %v278, 4294901760
        %v2242 = vsub.f32 %v278, %v2241
        %2243 = vmatpush1.msra.mxu0 %v2242
        %v2244 = vand.u32 %v277, 4294901760
        %v2245 = vsub.f32 %v277, %v2244
        %2246 = vmatprep.subr.mxu0 %v2245
        %v2247 = vand.u32 %v276, 4294901760
        %v2248 = vsub.f32 %v276, %v2247
        %2249 = vmatpush1.msra.mxu0 %v2248
        %v2250 = vand.u32 %v275, 4294901760
        %v2251 = vsub.f32 %v275, %v2250
        %2252 = vmatprep.subr.mxu0 %v2251
        %v2253 = vand.u32 %v274, 4294901760
        %v2254 = vsub.f32 %v274, %v2253
        %2255 = vmatpush1.msra.mxu0 %v2254
        %v2256 = vand.u32 %v337, 4294901760
        %v2257 = vsub.f32 %v337, %v2256
        %2258 = vmatprep.subr.mxu0 %v2257
        %v2259 = vand.u32 %v336, 4294901760
        %v2260 = vsub.f32 %v336, %v2259
        %2261 = vmatpush2.msra.mxu0 %v2260
        %v2262 = vand.u32 %v335, 4294901760
        %v2263 = vsub.f32 %v335, %v2262
        %2264 = vmatprep.subr.mxu0 %v2263
        %v2265 = vand.u32 %v334, 4294901760
        %v2266 = vsub.f32 %v334, %v2265
        %2267 = vmatpush2.msra.mxu0 %v2266
        %v2268 = vand.u32 %v333, 4294901760
        %v2269 = vsub.f32 %v333, %v2268
        %2270 = vmatprep.subr.mxu0 %v2269
        %v2271 = vand.u32 %v332, 4294901760
        %v2272 = vsub.f32 %v332, %v2271
        %2273 = vmatpush2.msra.mxu0 %v2272
        %v2274 = vand.u32 %v331, 4294901760
        %v2275 = vsub.f32 %v331, %v2274
        %2276 = vmatprep.subr.mxu0 %v2275
        %v2277 = vand.u32 %v330, 4294901760
        %v2278 = vsub.f32 %v330, %v2277
        %2279 = vmatpush2.msra.mxu0 %v2278
        %v2280 = vand.u32 %v329, 4294901760
        %v2281 = vsub.f32 %v329, %v2280
        %2282 = vmatprep.subr.mxu0 %v2281
        %v2283 = vand.u32 %v328, 4294901760
        %v2284 = vsub.f32 %v328, %v2283
        %2285 = vmatpush2.msra.mxu0 %v2284
        %v2286 = vand.u32 %v327, 4294901760
        %v2287 = vsub.f32 %v327, %v2286
        %2288 = vmatprep.subr.mxu0 %v2287
        %v2289 = vand.u32 %v326, 4294901760
        %v2290 = vsub.f32 %v326, %v2289
        %2291 = vmatpush2.msra.mxu0 %v2290
        %v2292 = vand.u32 %v325, 4294901760
        %v2293 = vsub.f32 %v325, %v2292
        %2294 = vmatprep.subr.mxu0 %v2293
        %v2295 = vand.u32 %v324, 4294901760
        %v2296 = vsub.f32 %v324, %v2295
        %2297 = vmatpush2.msra.mxu0 %v2296
        %v2298 = vand.u32 %v323, 4294901760
        %v2299 = vsub.f32 %v323, %v2298
        %2300 = vmatprep.subr.mxu0 %v2299
        %v2301 = vand.u32 %v322, 4294901760
        %v2302 = vsub.f32 %v322, %v2301
        %2303 = vmatpush2.msra.mxu0 %v2302
        %v2304 = vand.u32 %v321, 4294901760
        %v2305 = vsub.f32 %v321, %v2304
        %2306 = vmatprep.subr.mxu0 %v2305
        %v2307 = vand.u32 %v320, 4294901760
        %v2308 = vsub.f32 %v320, %v2307
        %2309 = vmatpush2.msra.mxu0 %v2308
        %v2310 = vand.u32 %v319, 4294901760
        %v2311 = vsub.f32 %v319, %v2310
        %2312 = vmatprep.subr.mxu0 %v2311
        %v2313 = vand.u32 %v318, 4294901760
        %v2314 = vsub.f32 %v318, %v2313
        %2315 = vmatpush2.msra.mxu0 %v2314
        %v2316 = vand.u32 %v317, 4294901760
        %v2317 = vsub.f32 %v317, %v2316
        %2318 = vmatprep.subr.mxu0 %v2317
        %v2319 = vand.u32 %v316, 4294901760
        %v2320 = vsub.f32 %v316, %v2319
        %2321 = vmatpush2.msra.mxu0 %v2320
        %v2322 = vand.u32 %v315, 4294901760
        %v2323 = vsub.f32 %v315, %v2322
        %2324 = vmatprep.subr.mxu0 %v2323
        %v2325 = vand.u32 %v314, 4294901760
        %v2326 = vsub.f32 %v314, %v2325
        %2327 = vmatpush2.msra.mxu0 %v2326
        %v2328 = vand.u32 %v313, 4294901760
        %v2329 = vsub.f32 %v313, %v2328
        %2330 = vmatprep.subr.mxu0 %v2329
        %v2331 = vand.u32 %v312, 4294901760
        %v2332 = vsub.f32 %v312, %v2331
        %2333 = vmatpush2.msra.mxu0 %v2332
        %v2334 = vand.u32 %v311, 4294901760
        %v2335 = vsub.f32 %v311, %v2334
        %2336 = vmatprep.subr.mxu0 %v2335
        %v2337 = vand.u32 %v310, 4294901760
        %v2338 = vsub.f32 %v310, %v2337
        %2339 = vmatpush2.msra.mxu0 %v2338
        %v2340 = vand.u32 %v309, 4294901760
        %v2341 = vsub.f32 %v309, %v2340
        %2342 = vmatprep.subr.mxu0 %v2341
        %v2343 = vand.u32 %v308, 4294901760
        %v2344 = vsub.f32 %v308, %v2343
        %2345 = vmatpush2.msra.mxu0 %v2344
        %v2346 = vand.u32 %v307, 4294901760
        %v2347 = vsub.f32 %v307, %v2346
        %2348 = vmatprep.subr.mxu0 %v2347
        %v2349 = vand.u32 %v306, 4294901760
        %v2350 = vsub.f32 %v306, %v2349
        %2351 = vmatpush2.msra.mxu0 %v2350
        %v2352 = vand.u32 %v209, 4294901760
        %v2353 = vsub.f32 %v209, %v2352
        %2354 = vmatprep.mubr.f32.mxu0 %v2353
        %v2355 = vand.u32 %v202, 4294901760
        %v2356 = vsub.f32 %v202, %v2355
        %2357 = vmatmul.mubr.f32.gmra.mxu0 %v2356
        %v2358 = vpop.f32.mrf.mxu0
        %v2359 = vadd.f32 %v2156, %v2358
        %v2360 = vpop.f32.mrf.mxu0
        %v2361 = vadd.f32 %v2158, %v2360
        %2362 = vdwg.mxu0
        %v2363 = vand.u32 %v305, 4294901760
        %2364 = vmatprep.subr.mxu0 %v2363
        %v2365 = vand.u32 %v304, 4294901760
        %2366 = vmatpush1.msra.mxu0 %v2365
        %v2367 = vand.u32 %v303, 4294901760
        %2368 = vmatprep.subr.mxu0 %v2367
        %v2369 = vand.u32 %v302, 4294901760
        %2370 = vmatpush1.msra.mxu0 %v2369
        %v2371 = vand.u32 %v301, 4294901760
        %2372 = vmatprep.subr.mxu0 %v2371
        %v2373 = vand.u32 %v300, 4294901760
        %2374 = vmatpush1.msra.mxu0 %v2373
        %v2375 = vand.u32 %v299, 4294901760
        %2376 = vmatprep.subr.mxu0 %v2375
        %v2377 = vand.u32 %v298, 4294901760
        %2378 = vmatpush1.msra.mxu0 %v2377
        %v2379 = vand.u32 %v297, 4294901760
        %2380 = vmatprep.subr.mxu0 %v2379
        %v2381 = vand.u32 %v296, 4294901760
        %2382 = vmatpush1.msra.mxu0 %v2381
        %v2383 = vand.u32 %v295, 4294901760
        %2384 = vmatprep.subr.mxu0 %v2383
        %v2385 = vand.u32 %v294, 4294901760
        %2386 = vmatpush1.msra.mxu0 %v2385
        %v2387 = vand.u32 %v293, 4294901760
        %2388 = vmatprep.subr.mxu0 %v2387
        %v2389 = vand.u32 %v292, 4294901760
        %2390 = vmatpush1.msra.mxu0 %v2389
        %v2391 = vand.u32 %v291, 4294901760
        %2392 = vmatprep.subr.mxu0 %v2391
        %v2393 = vand.u32 %v290, 4294901760
        %2394 = vmatpush1.msra.mxu0 %v2393
        %v2395 = vand.u32 %v289, 4294901760
        %2396 = vmatprep.subr.mxu0 %v2395
        %v2397 = vand.u32 %v288, 4294901760
        %2398 = vmatpush1.msra.mxu0 %v2397
        %v2399 = vand.u32 %v287, 4294901760
        %2400 = vmatprep.subr.mxu0 %v2399
        %v2401 = vand.u32 %v286, 4294901760
        %2402 = vmatpush1.msra.mxu0 %v2401
        %v2403 = vand.u32 %v285, 4294901760
        %2404 = vmatprep.subr.mxu0 %v2403
        %v2405 = vand.u32 %v284, 4294901760
        %2406 = vmatpush1.msra.mxu0 %v2405
        %v2407 = vand.u32 %v283, 4294901760
        %2408 = vmatprep.subr.mxu0 %v2407
        %v2409 = vand.u32 %v282, 4294901760
        %2410 = vmatpush1.msra.mxu0 %v2409
        %v2411 = vand.u32 %v281, 4294901760
        %2412 = vmatprep.subr.mxu0 %v2411
        %v2413 = vand.u32 %v280, 4294901760
        %2414 = vmatpush1.msra.mxu0 %v2413
        %v2415 = vand.u32 %v279, 4294901760
        %2416 = vmatprep.subr.mxu0 %v2415
        %v2417 = vand.u32 %v278, 4294901760
        %2418 = vmatpush1.msra.mxu0 %v2417
        %v2419 = vand.u32 %v277, 4294901760
        %2420 = vmatprep.subr.mxu0 %v2419
        %v2421 = vand.u32 %v276, 4294901760
        %2422 = vmatpush1.msra.mxu0 %v2421
        %v2423 = vand.u32 %v275, 4294901760
        %2424 = vmatprep.subr.mxu0 %v2423
        %v2425 = vand.u32 %v274, 4294901760
        %2426 = vmatpush1.msra.mxu0 %v2425
        %v2427 = vand.u32 %v337, 4294901760
        %2428 = vmatprep.subr.mxu0 %v2427
        %v2429 = vand.u32 %v336, 4294901760
        %2430 = vmatpush2.msra.mxu0 %v2429
        %v2431 = vand.u32 %v335, 4294901760
        %2432 = vmatprep.subr.mxu0 %v2431
        %v2433 = vand.u32 %v334, 4294901760
        %2434 = vmatpush2.msra.mxu0 %v2433
        %v2435 = vand.u32 %v333, 4294901760
        %2436 = vmatprep.subr.mxu0 %v2435
        %v2437 = vand.u32 %v332, 4294901760
        %2438 = vmatpush2.msra.mxu0 %v2437
        %v2439 = vand.u32 %v331, 4294901760
        %2440 = vmatprep.subr.mxu0 %v2439
        %v2441 = vand.u32 %v330, 4294901760
        %2442 = vmatpush2.msra.mxu0 %v2441
        %v2443 = vand.u32 %v329, 4294901760
        %2444 = vmatprep.subr.mxu0 %v2443
        %v2445 = vand.u32 %v328, 4294901760
        %2446 = vmatpush2.msra.mxu0 %v2445
        %v2447 = vand.u32 %v327, 4294901760
        %2448 = vmatprep.subr.mxu0 %v2447
        %v2449 = vand.u32 %v326, 4294901760
        %2450 = vmatpush2.msra.mxu0 %v2449
        %v2451 = vand.u32 %v325, 4294901760
        %2452 = vmatprep.subr.mxu0 %v2451
        %v2453 = vand.u32 %v324, 4294901760
        %2454 = vmatpush2.msra.mxu0 %v2453
        %v2455 = vand.u32 %v323, 4294901760
        %2456 = vmatprep.subr.mxu0 %v2455
        %v2457 = vand.u32 %v322, 4294901760
        %2458 = vmatpush2.msra.mxu0 %v2457
        %v2459 = vand.u32 %v321, 4294901760
        %2460 = vmatprep.subr.mxu0 %v2459
        %v2461 = vand.u32 %v320, 4294901760
        %2462 = vmatpush2.msra.mxu0 %v2461
        %v2463 = vand.u32 %v319, 4294901760
        %2464 = vmatprep.subr.mxu0 %v2463
        %v2465 = vand.u32 %v318, 4294901760
        %2466 = vmatpush2.msra.mxu0 %v2465
        %v2467 = vand.u32 %v317, 4294901760
        %2468 = vmatprep.subr.mxu0 %v2467
        %v2469 = vand.u32 %v316, 4294901760
        %2470 = vmatpush2.msra.mxu0 %v2469
        %v2471 = vand.u32 %v315, 4294901760
        %2472 = vmatprep.subr.mxu0 %v2471
        %v2473 = vand.u32 %v314, 4294901760
        %2474 = vmatpush2.msra.mxu0 %v2473
        %v2475 = vand.u32 %v313, 4294901760
        %2476 = vmatprep.subr.mxu0 %v2475
        %v2477 = vand.u32 %v312, 4294901760
        %2478 = vmatpush2.msra.mxu0 %v2477
        %v2479 = vand.u32 %v311, 4294901760
        %2480 = vmatprep.subr.mxu0 %v2479
        %v2481 = vand.u32 %v310, 4294901760
        %2482 = vmatpush2.msra.mxu0 %v2481
        %v2483 = vand.u32 %v309, 4294901760
        %2484 = vmatprep.subr.mxu0 %v2483
        %v2485 = vand.u32 %v308, 4294901760
        %2486 = vmatpush2.msra.mxu0 %v2485
        %v2487 = vand.u32 %v307, 4294901760
        %2488 = vmatprep.subr.mxu0 %v2487
        %v2489 = vand.u32 %v306, 4294901760
        %2490 = vmatpush2.msra.mxu0 %v2489
        %v2491 = vand.u32 %v209, 4294901760
        %v2492 = vsub.f32 %v209, %v2491
        %v2493 = vand.u32 %v2492, 4294901760
        %2494 = vmatprep.mubr.f32.mxu0 %v2493
        %v2495 = vand.u32 %v202, 4294901760
        %v2496 = vsub.f32 %v202, %v2495
        %v2497 = vand.u32 %v2496, 4294901760
        %2498 = vmatmul.mubr.f32.gmra.mxu0 %v2497
        %v2499 = vpop.f32.mrf.mxu0
        %v2500 = vadd.f32 %v2359, %v2499
        %v2501 = vpop.f32.mrf.mxu0
        %v2502 = vadd.f32 %v2361, %v2501
        %2503 = vdwg.mxu0
        %v2504 = vand.u32 %v305, 4294901760
        %v2505 = vsub.f32 %v305, %v2504
        %v2506 = vand.u32 %v2505, 4294901760
        %2507 = vmatprep.subr.mxu0 %v2506
        %v2508 = vand.u32 %v304, 4294901760
        %v2509 = vsub.f32 %v304, %v2508
        %v2510 = vand.u32 %v2509, 4294901760
        %2511 = vmatpush1.msra.mxu0 %v2510
        %v2512 = vand.u32 %v303, 4294901760
        %v2513 = vsub.f32 %v303, %v2512
        %v2514 = vand.u32 %v2513, 4294901760
        %2515 = vmatprep.subr.mxu0 %v2514
        %v2516 = vand.u32 %v302, 4294901760
        %v2517 = vsub.f32 %v302, %v2516
        %v2518 = vand.u32 %v2517, 4294901760
        %2519 = vmatpush1.msra.mxu0 %v2518
        %v2520 = vand.u32 %v301, 4294901760
        %v2521 = vsub.f32 %v301, %v2520
        %v2522 = vand.u32 %v2521, 4294901760
        %2523 = vmatprep.subr.mxu0 %v2522
        %v2524 = vand.u32 %v300, 4294901760
        %v2525 = vsub.f32 %v300, %v2524
        %v2526 = vand.u32 %v2525, 4294901760
        %2527 = vmatpush1.msra.mxu0 %v2526
        %v2528 = vand.u32 %v299, 4294901760
        %v2529 = vsub.f32 %v299, %v2528
        %v2530 = vand.u32 %v2529, 4294901760
        %2531 = vmatprep.subr.mxu0 %v2530
        %v2532 = vand.u32 %v298, 4294901760
        %v2533 = vsub.f32 %v298, %v2532
        %v2534 = vand.u32 %v2533, 4294901760
        %2535 = vmatpush1.msra.mxu0 %v2534
        %v2536 = vand.u32 %v297, 4294901760
        %v2537 = vsub.f32 %v297, %v2536
        %v2538 = vand.u32 %v2537, 4294901760
        %2539 = vmatprep.subr.mxu0 %v2538
        %v2540 = vand.u32 %v296, 4294901760
        %v2541 = vsub.f32 %v296, %v2540
        %v2542 = vand.u32 %v2541, 4294901760
        %2543 = vmatpush1.msra.mxu0 %v2542
        %v2544 = vand.u32 %v295, 4294901760
        %v2545 = vsub.f32 %v295, %v2544
        %v2546 = vand.u32 %v2545, 4294901760
        %2547 = vmatprep.subr.mxu0 %v2546
        %v2548 = vand.u32 %v294, 4294901760
        %v2549 = vsub.f32 %v294, %v2548
        %v2550 = vand.u32 %v2549, 4294901760
        %2551 = vmatpush1.msra.mxu0 %v2550
        %v2552 = vand.u32 %v293, 4294901760
        %v2553 = vsub.f32 %v293, %v2552
        %v2554 = vand.u32 %v2553, 4294901760
        %2555 = vmatprep.subr.mxu0 %v2554
        %v2556 = vand.u32 %v292, 4294901760
        %v2557 = vsub.f32 %v292, %v2556
        %v2558 = vand.u32 %v2557, 4294901760
        %2559 = vmatpush1.msra.mxu0 %v2558
        %v2560 = vand.u32 %v291, 4294901760
        %v2561 = vsub.f32 %v291, %v2560
        %v2562 = vand.u32 %v2561, 4294901760
        %2563 = vmatprep.subr.mxu0 %v2562
        %v2564 = vand.u32 %v290, 4294901760
        %v2565 = vsub.f32 %v290, %v2564
        %v2566 = vand.u32 %v2565, 4294901760
        %2567 = vmatpush1.msra.mxu0 %v2566
        %v2568 = vand.u32 %v289, 4294901760
        %v2569 = vsub.f32 %v289, %v2568
        %v2570 = vand.u32 %v2569, 4294901760
        %2571 = vmatprep.subr.mxu0 %v2570
        %v2572 = vand.u32 %v288, 4294901760
        %v2573 = vsub.f32 %v288, %v2572
        %v2574 = vand.u32 %v2573, 4294901760
        %2575 = vmatpush1.msra.mxu0 %v2574
        %v2576 = vand.u32 %v287, 4294901760
        %v2577 = vsub.f32 %v287, %v2576
        %v2578 = vand.u32 %v2577, 4294901760
        %2579 = vmatprep.subr.mxu0 %v2578
        %v2580 = vand.u32 %v286, 4294901760
        %v2581 = vsub.f32 %v286, %v2580
        %v2582 = vand.u32 %v2581, 4294901760
        %2583 = vmatpush1.msra.mxu0 %v2582
        %v2584 = vand.u32 %v285, 4294901760
        %v2585 = vsub.f32 %v285, %v2584
        %v2586 = vand.u32 %v2585, 4294901760
        %2587 = vmatprep.subr.mxu0 %v2586
        %v2588 = vand.u32 %v284, 4294901760
        %v2589 = vsub.f32 %v284, %v2588
        %v2590 = vand.u32 %v2589, 4294901760
        %2591 = vmatpush1.msra.mxu0 %v2590
        %v2592 = vand.u32 %v283, 4294901760
        %v2593 = vsub.f32 %v283, %v2592
        %v2594 = vand.u32 %v2593, 4294901760
        %2595 = vmatprep.subr.mxu0 %v2594
        %v2596 = vand.u32 %v282, 4294901760
        %v2597 = vsub.f32 %v282, %v2596
        %v2598 = vand.u32 %v2597, 4294901760
        %2599 = vmatpush1.msra.mxu0 %v2598
        %v2600 = vand.u32 %v281, 4294901760
        %v2601 = vsub.f32 %v281, %v2600
        %v2602 = vand.u32 %v2601, 4294901760
        %2603 = vmatprep.subr.mxu0 %v2602
        %v2604 = vand.u32 %v280, 4294901760
        %v2605 = vsub.f32 %v280, %v2604
        %v2606 = vand.u32 %v2605, 4294901760
        %2607 = vmatpush1.msra.mxu0 %v2606
        %v2608 = vand.u32 %v279, 4294901760
        %v2609 = vsub.f32 %v279, %v2608
        %v2610 = vand.u32 %v2609, 4294901760
        %2611 = vmatprep.subr.mxu0 %v2610
        %v2612 = vand.u32 %v278, 4294901760
        %v2613 = vsub.f32 %v278, %v2612
        %v2614 = vand.u32 %v2613, 4294901760
        %2615 = vmatpush1.msra.mxu0 %v2614
        %v2616 = vand.u32 %v277, 4294901760
        %v2617 = vsub.f32 %v277, %v2616
        %v2618 = vand.u32 %v2617, 4294901760
        %2619 = vmatprep.subr.mxu0 %v2618
        %v2620 = vand.u32 %v276, 4294901760
        %v2621 = vsub.f32 %v276, %v2620
        %v2622 = vand.u32 %v2621, 4294901760
        %2623 = vmatpush1.msra.mxu0 %v2622
        %v2624 = vand.u32 %v275, 4294901760
        %v2625 = vsub.f32 %v275, %v2624
        %v2626 = vand.u32 %v2625, 4294901760
        %2627 = vmatprep.subr.mxu0 %v2626
        %v2628 = vand.u32 %v274, 4294901760
        %v2629 = vsub.f32 %v274, %v2628
        %v2630 = vand.u32 %v2629, 4294901760
        %2631 = vmatpush1.msra.mxu0 %v2630
        %v2632 = vand.u32 %v337, 4294901760
        %v2633 = vsub.f32 %v337, %v2632
        %v2634 = vand.u32 %v2633, 4294901760
        %2635 = vmatprep.subr.mxu0 %v2634
        %v2636 = vand.u32 %v336, 4294901760
        %v2637 = vsub.f32 %v336, %v2636
        %v2638 = vand.u32 %v2637, 4294901760
        %2639 = vmatpush2.msra.mxu0 %v2638
        %v2640 = vand.u32 %v335, 4294901760
        %v2641 = vsub.f32 %v335, %v2640
        %v2642 = vand.u32 %v2641, 4294901760
        %2643 = vmatprep.subr.mxu0 %v2642
        %v2644 = vand.u32 %v334, 4294901760
        %v2645 = vsub.f32 %v334, %v2644
        %v2646 = vand.u32 %v2645, 4294901760
        %2647 = vmatpush2.msra.mxu0 %v2646
        %v2648 = vand.u32 %v333, 4294901760
        %v2649 = vsub.f32 %v333, %v2648
        %v2650 = vand.u32 %v2649, 4294901760
        %2651 = vmatprep.subr.mxu0 %v2650
        %v2652 = vand.u32 %v332, 4294901760
        %v2653 = vsub.f32 %v332, %v2652
        %v2654 = vand.u32 %v2653, 4294901760
        %2655 = vmatpush2.msra.mxu0 %v2654
        %v2656 = vand.u32 %v331, 4294901760
        %v2657 = vsub.f32 %v331, %v2656
        %v2658 = vand.u32 %v2657, 4294901760
        %2659 = vmatprep.subr.mxu0 %v2658
        %v2660 = vand.u32 %v330, 4294901760
        %v2661 = vsub.f32 %v330, %v2660
        %v2662 = vand.u32 %v2661, 4294901760
        %2663 = vmatpush2.msra.mxu0 %v2662
        %v2664 = vand.u32 %v329, 4294901760
        %v2665 = vsub.f32 %v329, %v2664
        %v2666 = vand.u32 %v2665, 4294901760
        %2667 = vmatprep.subr.mxu0 %v2666
        %v2668 = vand.u32 %v328, 4294901760
        %v2669 = vsub.f32 %v328, %v2668
        %v2670 = vand.u32 %v2669, 4294901760
        %2671 = vmatpush2.msra.mxu0 %v2670
        %v2672 = vand.u32 %v327, 4294901760
        %v2673 = vsub.f32 %v327, %v2672
        %v2674 = vand.u32 %v2673, 4294901760
        %2675 = vmatprep.subr.mxu0 %v2674
        %v2676 = vand.u32 %v326, 4294901760
        %v2677 = vsub.f32 %v326, %v2676
        %v2678 = vand.u32 %v2677, 4294901760
        %2679 = vmatpush2.msra.mxu0 %v2678
        %v2680 = vand.u32 %v325, 4294901760
        %v2681 = vsub.f32 %v325, %v2680
        %v2682 = vand.u32 %v2681, 4294901760
        %2683 = vmatprep.subr.mxu0 %v2682
        %v2684 = vand.u32 %v324, 4294901760
        %v2685 = vsub.f32 %v324, %v2684
        %v2686 = vand.u32 %v2685, 4294901760
        %2687 = vmatpush2.msra.mxu0 %v2686
        %v2688 = vand.u32 %v323, 4294901760
        %v2689 = vsub.f32 %v323, %v2688
        %v2690 = vand.u32 %v2689, 4294901760
        %2691 = vmatprep.subr.mxu0 %v2690
        %v2692 = vand.u32 %v322, 4294901760
        %v2693 = vsub.f32 %v322, %v2692
        %v2694 = vand.u32 %v2693, 4294901760
        %2695 = vmatpush2.msra.mxu0 %v2694
        %v2696 = vand.u32 %v321, 4294901760
        %v2697 = vsub.f32 %v321, %v2696
        %v2698 = vand.u32 %v2697, 4294901760
        %2699 = vmatprep.subr.mxu0 %v2698
        %v2700 = vand.u32 %v320, 4294901760
        %v2701 = vsub.f32 %v320, %v2700
        %v2702 = vand.u32 %v2701, 4294901760
        %2703 = vmatpush2.msra.mxu0 %v2702
        %v2704 = vand.u32 %v319, 4294901760
        %v2705 = vsub.f32 %v319, %v2704
        %v2706 = vand.u32 %v2705, 4294901760
        %2707 = vmatprep.subr.mxu0 %v2706
        %v2708 = vand.u32 %v318, 4294901760
        %v2709 = vsub.f32 %v318, %v2708
        %v2710 = vand.u32 %v2709, 4294901760
        %2711 = vmatpush2.msra.mxu0 %v2710
        %v2712 = vand.u32 %v317, 4294901760
        %v2713 = vsub.f32 %v317, %v2712
        %v2714 = vand.u32 %v2713, 4294901760
        %2715 = vmatprep.subr.mxu0 %v2714
        %v2716 = vand.u32 %v316, 4294901760
        %v2717 = vsub.f32 %v316, %v2716
        %v2718 = vand.u32 %v2717, 4294901760
        %2719 = vmatpush2.msra.mxu0 %v2718
        %v2720 = vand.u32 %v315, 4294901760
        %v2721 = vsub.f32 %v315, %v2720
        %v2722 = vand.u32 %v2721, 4294901760
        %2723 = vmatprep.subr.mxu0 %v2722
        %v2724 = vand.u32 %v314, 4294901760
        %v2725 = vsub.f32 %v314, %v2724
        %v2726 = vand.u32 %v2725, 4294901760
        %2727 = vmatpush2.msra.mxu0 %v2726
        %v2728 = vand.u32 %v313, 4294901760
        %v2729 = vsub.f32 %v313, %v2728
        %v2730 = vand.u32 %v2729, 4294901760
        %2731 = vmatprep.subr.mxu0 %v2730
        %v2732 = vand.u32 %v312, 4294901760
        %v2733 = vsub.f32 %v312, %v2732
        %v2734 = vand.u32 %v2733, 4294901760
        %2735 = vmatpush2.msra.mxu0 %v2734
        %v2736 = vand.u32 %v311, 4294901760
        %v2737 = vsub.f32 %v311, %v2736
        %v2738 = vand.u32 %v2737, 4294901760
        %2739 = vmatprep.subr.mxu0 %v2738
        %v2740 = vand.u32 %v310, 4294901760
        %v2741 = vsub.f32 %v310, %v2740
        %v2742 = vand.u32 %v2741, 4294901760
        %2743 = vmatpush2.msra.mxu0 %v2742
        %v2744 = vand.u32 %v309, 4294901760
        %v2745 = vsub.f32 %v309, %v2744
        %v2746 = vand.u32 %v2745, 4294901760
        %2747 = vmatprep.subr.mxu0 %v2746
        %v2748 = vand.u32 %v308, 4294901760
        %v2749 = vsub.f32 %v308, %v2748
        %v2750 = vand.u32 %v2749, 4294901760
        %2751 = vmatpush2.msra.mxu0 %v2750
        %v2752 = vand.u32 %v307, 4294901760
        %v2753 = vsub.f32 %v307, %v2752
        %v2754 = vand.u32 %v2753, 4294901760
        %2755 = vmatprep.subr.mxu0 %v2754
        %v2756 = vand.u32 %v306, 4294901760
        %v2757 = vsub.f32 %v306, %v2756
        %v2758 = vand.u32 %v2757, 4294901760
        %2759 = vmatpush2.msra.mxu0 %v2758
        %v2760 = vand.u32 %v209, 4294901760
        %2761 = vmatprep.mubr.f32.mxu0 %v2760
        %v2762 = vand.u32 %v202, 4294901760
        %2763 = vmatmul.mubr.f32.gmra.mxu0 %v2762
        %v2764 = vpop.f32.mrf.mxu0
        %v2765 = vadd.f32 %v2500, %v2764
        %v2766 = vpop.f32.mrf.mxu0
        %v2767 = vadd.f32 %v2502, %v2766
        %2768 = vdwg.mxu0
        %v2769 = vand.u32 %v305, 4294901760
        %2770 = vmatprep.subr.mxu0 %v2769
        %v2771 = vand.u32 %v304, 4294901760
        %2772 = vmatpush1.msra.mxu0 %v2771
        %v2773 = vand.u32 %v303, 4294901760
        %2774 = vmatprep.subr.mxu0 %v2773
        %v2775 = vand.u32 %v302, 4294901760
        %2776 = vmatpush1.msra.mxu0 %v2775
        %v2777 = vand.u32 %v301, 4294901760
        %2778 = vmatprep.subr.mxu0 %v2777
        %v2779 = vand.u32 %v300, 4294901760
        %2780 = vmatpush1.msra.mxu0 %v2779
        %v2781 = vand.u32 %v299, 4294901760
        %2782 = vmatprep.subr.mxu0 %v2781
        %v2783 = vand.u32 %v298, 4294901760
        %2784 = vmatpush1.msra.mxu0 %v2783
        %v2785 = vand.u32 %v297, 4294901760
        %2786 = vmatprep.subr.mxu0 %v2785
        %v2787 = vand.u32 %v296, 4294901760
        %2788 = vmatpush1.msra.mxu0 %v2787
        %v2789 = vand.u32 %v295, 4294901760
        %2790 = vmatprep.subr.mxu0 %v2789
        %v2791 = vand.u32 %v294, 4294901760
        %2792 = vmatpush1.msra.mxu0 %v2791
        %v2793 = vand.u32 %v293, 4294901760
        %2794 = vmatprep.subr.mxu0 %v2793
        %v2795 = vand.u32 %v292, 4294901760
        %2796 = vmatpush1.msra.mxu0 %v2795
        %v2797 = vand.u32 %v291, 4294901760
        %2798 = vmatprep.subr.mxu0 %v2797
        %v2799 = vand.u32 %v290, 4294901760
        %2800 = vmatpush1.msra.mxu0 %v2799
        %v2801 = vand.u32 %v289, 4294901760
        %2802 = vmatprep.subr.mxu0 %v2801
        %v2803 = vand.u32 %v288, 4294901760
        %2804 = vmatpush1.msra.mxu0 %v2803
        %v2805 = vand.u32 %v287, 4294901760
        %2806 = vmatprep.subr.mxu0 %v2805
        %v2807 = vand.u32 %v286, 4294901760
        %2808 = vmatpush1.msra.mxu0 %v2807
        %v2809 = vand.u32 %v285, 4294901760
        %2810 = vmatprep.subr.mxu0 %v2809
        %v2811 = vand.u32 %v284, 4294901760
        %2812 = vmatpush1.msra.mxu0 %v2811
        %v2813 = vand.u32 %v283, 4294901760
        %2814 = vmatprep.subr.mxu0 %v2813
        %v2815 = vand.u32 %v282, 4294901760
        %2816 = vmatpush1.msra.mxu0 %v2815
        %v2817 = vand.u32 %v281, 4294901760
        %2818 = vmatprep.subr.mxu0 %v2817
        %v2819 = vand.u32 %v280, 4294901760
        %2820 = vmatpush1.msra.mxu0 %v2819
        %v2821 = vand.u32 %v279, 4294901760
        %2822 = vmatprep.subr.mxu0 %v2821
        %v2823 = vand.u32 %v278, 4294901760
        %2824 = vmatpush1.msra.mxu0 %v2823
        %v2825 = vand.u32 %v277, 4294901760
        %2826 = vmatprep.subr.mxu0 %v2825
        %v2827 = vand.u32 %v276, 4294901760
        %2828 = vmatpush1.msra.mxu0 %v2827
        %v2829 = vand.u32 %v275, 4294901760
        %2830 = vmatprep.subr.mxu0 %v2829
        %v2831 = vand.u32 %v274, 4294901760
        %2832 = vmatpush1.msra.mxu0 %v2831
        %v2833 = vand.u32 %v337, 4294901760
        %2834 = vmatprep.subr.mxu0 %v2833
        %v2835 = vand.u32 %v336, 4294901760
        %2836 = vmatpush2.msra.mxu0 %v2835
        %v2837 = vand.u32 %v335, 4294901760
        %2838 = vmatprep.subr.mxu0 %v2837
        %v2839 = vand.u32 %v334, 4294901760
        %2840 = vmatpush2.msra.mxu0 %v2839
        %v2841 = vand.u32 %v333, 4294901760
        %2842 = vmatprep.subr.mxu0 %v2841
        %v2843 = vand.u32 %v332, 4294901760
        %2844 = vmatpush2.msra.mxu0 %v2843
        %v2845 = vand.u32 %v331, 4294901760
        %2846 = vmatprep.subr.mxu0 %v2845
        %v2847 = vand.u32 %v330, 4294901760
        %2848 = vmatpush2.msra.mxu0 %v2847
        %v2849 = vand.u32 %v329, 4294901760
        %2850 = vmatprep.subr.mxu0 %v2849
        %v2851 = vand.u32 %v328, 4294901760
        %2852 = vmatpush2.msra.mxu0 %v2851
        %v2853 = vand.u32 %v327, 4294901760
        %2854 = vmatprep.subr.mxu0 %v2853
        %v2855 = vand.u32 %v326, 4294901760
        %2856 = vmatpush2.msra.mxu0 %v2855
        %v2857 = vand.u32 %v325, 4294901760
        %2858 = vmatprep.subr.mxu0 %v2857
        %v2859 = vand.u32 %v324, 4294901760
        %2860 = vmatpush2.msra.mxu0 %v2859
        %v2861 = vand.u32 %v323, 4294901760
        %2862 = vmatprep.subr.mxu0 %v2861
        %v2863 = vand.u32 %v322, 4294901760
        %2864 = vmatpush2.msra.mxu0 %v2863
        %v2865 = vand.u32 %v321, 4294901760
        %2866 = vmatprep.subr.mxu0 %v2865
        %v2867 = vand.u32 %v320, 4294901760
        %2868 = vmatpush2.msra.mxu0 %v2867
        %v2869 = vand.u32 %v319, 4294901760
        %2870 = vmatprep.subr.mxu0 %v2869
        %v2871 = vand.u32 %v318, 4294901760
        %2872 = vmatpush2.msra.mxu0 %v2871
        %v2873 = vand.u32 %v317, 4294901760
        %2874 = vmatprep.subr.mxu0 %v2873
        %v2875 = vand.u32 %v316, 4294901760
        %2876 = vmatpush2.msra.mxu0 %v2875
        %v2877 = vand.u32 %v315, 4294901760
        %2878 = vmatprep.subr.mxu0 %v2877
        %v2879 = vand.u32 %v314, 4294901760
        %2880 = vmatpush2.msra.mxu0 %v2879
        %v2881 = vand.u32 %v313, 4294901760
        %2882 = vmatprep.subr.mxu0 %v2881
        %v2883 = vand.u32 %v312, 4294901760
        %2884 = vmatpush2.msra.mxu0 %v2883
        %v2885 = vand.u32 %v311, 4294901760
        %2886 = vmatprep.subr.mxu0 %v2885
        %v2887 = vand.u32 %v310, 4294901760
        %2888 = vmatpush2.msra.mxu0 %v2887
        %v2889 = vand.u32 %v309, 4294901760
        %2890 = vmatprep.subr.mxu0 %v2889
        %v2891 = vand.u32 %v308, 4294901760
        %2892 = vmatpush2.msra.mxu0 %v2891
        %v2893 = vand.u32 %v307, 4294901760
        %2894 = vmatprep.subr.mxu0 %v2893
        %v2895 = vand.u32 %v306, 4294901760
        %2896 = vmatpush2.msra.mxu0 %v2895
        %v2897 = vand.u32 %v209, 4294901760
        %2898 = vmatprep.mubr.f32.mxu0 %v2897
        %v2899 = vand.u32 %v202, 4294901760
        %2900 = vmatmul.mubr.f32.gmra.mxu0 %v2899
        %v2901 = vpop.f32.mrf.mxu0
        %v2902 = vadd.f32 %v2765, %v2901
        %v2903 = vpop.f32.mrf.mxu0
        %v2904 = vadd.f32 %v2767, %v2903
        %2905 = vdwg.mxu0
        %v2906 = vsub.f32 0.0, %v2902
        %v2907 = vsub.f32 0.0, %v2904
        %v2908 = vmin.f32 %v2906, 80.0
        %v2909 = vmin.f32 %v2907, 80.0
        %v2910 = vmul.f32 %v2908, 1.442695
        %v2911 = vpow.pop %v2910
        %v2912 = vmul.f32 %v2909, 1.442695
        %v2913 = vpow.pop %v2912
        %v2914 = vadd.f32 %v2911, 1.0
        %v2915 = vadd.f32 %v2913, 1.0
        %v2916 = vrcp.pop %v2914
        %v2917 = vrcp.pop %v2915
        %v2918 = vmul.f32 %v2914, %v2916
        %v2919 = vmul.f32 %v2915, %v2917
        %v2920 = vsub.f32 2.0, %v2918
        %v2921 = vsub.f32 2.0, %v2919
        %v2922 = vmul.f32 %v2916, %v2920
        %v2923 = vmul.f32 %v2917, %v2921
        %v2924 = vlaneseq
        %v2925 = vshrl.u32 %v2924, 7
        %v2926 = vsub.s32 0, %v2925
        %v2927 = vrot.slane %v2922, %v2926
        %v2928 = vlaneseq
        %v2929 = vshrl.u32 %v2928, 7
        %v2930 = vsub.s32 0, %v2929
        %v2931 = vrot.slane %v2923, %v2930
        %v2934 = vcombine.low %v2927, %v2931
        %v2936 = vmul.f32 %v175, %v2934
        %2937 = vst [vmem:[%s174] sm:$0xff] %v2936
        %s2938 = sand.u32 %s75, 1
        %s2939 = scalar_lea.sflag [#allocation4], %s2938
        %s2940 = sand.u32 %s75, 1
        %s2941 = smul.addr %s2940, 8
        %s2942 = scalar_lea.vmem [#allocation7], %s2941
        // Predicated region
        $region37: #{tpu_custom_call.1} parent=27 // pred_check
          %p2943 = pneg %p85
        $region38: #{tpu_custom_call.1} parent=27 // pred_check_branch
          %2945 = sbr.rel (%p2943) target = $region40
        $region39: #{tpu_custom_call.1} parent=27 // pred_region
          %s2947 = ssub.s32 128, 128
          %2948 = vsyncadd %s2939, %s2947
          %s2949 = smul.addr %s20, 2
          %s2950 = smul.addr %s2949, 64
          %s2951 = scalar_lea.hbm %s2, %s2950
          %s2953 = sshll.u32 %s2942, 4
          %s2954 = int_to_ptr.vmem [resolvable:$true] %s2953
          %2956 = dma.vmem_to_hbm [thread:$0]  %s2954, 128, %s2951, %s2939
        $region40: #{tpu_custom_call.1} parent=27 // pred_fallthru
          _
      $region28: #{tpu_custom_call.1} parent=5 // pred_fallthru
        _
      %p2957 = scmp.le.s32.totalorder 2, %s15
      // Predicated region
      $region41: #{tpu_custom_call.1} parent=5 // pred_check
        %p2958 = pneg %p2957
      $region42: #{tpu_custom_call.1} parent=5 // pred_check_branch
        %2960 = sbr.rel (%p2958) target = $region44
      $region43: #{tpu_custom_call.1} parent=5 // pred_region
        %s2961 = ssub.s32 %s15, 2
        // Predicated region
        $region45: #{tpu_custom_call.1} parent=43 // pred_check
          %p2962 = pneg %p91
        $region46: #{tpu_custom_call.1} parent=43 // pred_check_branch
          %2964 = sbr.rel (%p2962) target = $region48
        $region47: #{tpu_custom_call.1} parent=43 // pred_region
          %s2965 = sand.u32 %s76, 1
          %s2966 = scalar_lea.sflag [#allocation4], %s2965
          %s2967 = sand.u32 %s76, 1
          %s2968 = smul.addr %s2967, 8
          %s2969 = scalar_lea.vmem [#allocation7], %s2968
          %2970 = dma.done %s2966, 128
        $region48: #{tpu_custom_call.1} parent=43 // pred_fallthru
          _
      $region44: #{tpu_custom_call.1} parent=5 // pred_fallthru
        _
    $region6: #{tpu_custom_call.1} parent=1 // loop_footer
      %s19 = sadd.s32 1, %s15
    $region7: #{tpu_custom_call.1} parent=1 // loop_footer_branch
      %14 = sbr.rel target = $region3
    $region8: #{tpu_custom_call.1} parent=1 // loop_exit
      _
    %2971 = vsyncpa [#allocation3], 1
    %s2972 = scalar_lea.sflag [#allocation3], 1
    %2973 = vsyncpa %s2972, 1
    %2974 = vsyncpa [#allocation6], 1
    %2975 = vsyncpa [#allocation4], 1
    %s2976 = scalar_lea.sflag [#allocation4], 1
    %2977 = vsyncpa %s2976, 1

</llo_original>
